<compile_context>
chip_gen: v7x
topology: tpu7x:2x2x1
jax: 0.10.0
libtpu: 0.0.40
codegen_flags: <defaults>
</compile_context>

<pallas_src>
import numpy as np
import jax
import jax.numpy as jnp
from jax.experimental import pallas as pl
from jax.experimental.pallas import tpu as pltpu

# ----------------------------- model dims (cfg.*) -----------------------------
D_X   = 64   # SITU_D_FEAT
D_CMD = 64   # SITU_D_CMD
D_CTX = 64   # SITU_D_CTX (= d_loc = d_ctx = d_h = d_m)
D_S   = D_CMD
D_H   = D_CTX
D_M   = D_CTX
T_ITERS = 2  # MSG_ITER_NUM

F32 = jnp.float32
BF16 = jnp.bfloat16


# ------------------------------- fused kernel ----------------------------------
def _lgcn_kernel(xs_ref, cmdh_ref, cmdout_ref, mask_ref,
                 wsq_ref, wcat_ref, wsg_ref, wug_ref, wmisc_ref,
                 out_ref):
    TB, N, d_x = xs_ref.shape
    M = TB * N

    def mm(a, b):
        # bf16 x bf16 operands, f32 accumulation on the MXU.
        return jnp.dot(a.astype(BF16), b.astype(BF16), preferred_element_type=F32)

    # ---- packed weights (bf16 slabs, constant across the grid) ----
    wx = wsq_ref[0]                          # map_x_loc weight (d_x, d_loc)
    w3 = wsq_ref[1]
    w4 = wsq_ref[2 + T_ITERS]
    w5 = wsq_ref[3 + T_ITERS]
    wcat = wcat_ref[...]                     # (3D, 3D), cols = [srcA | ftA | dst]
    wsg  = wsg_ref[...]                      # (D, 2D),  cols = [src-gate | ft-gate]
    w11  = wug_ref[0]                        # (2D, D) = [W11^T ; W11b^T]
    w12  = wug_ref[1]                        # (2D, D) = W12^T
    w1row   = wmisc_ref[0:1, :]              # (1, D) f32
    b3row   = wmisc_ref[1:2, :]              # (1, D) f32
    initmem = wmisc_ref[2:3, :]              # (1, D) f32

    # ---- loc_ctx_init (dropout = identity at inference) ----
    x_loc = mm(xs_ref[...].reshape(M, d_x), wx)               # (M, D)
    x_ctx = jnp.broadcast_to(initmem, (M, D_CTX))             # initMem.expand(...)

    # ---- textual command: t-independent part (hoisted out of the T loop) ----
    cmd_h   = cmdh_ref[...].reshape(TB, D_CMD)                # (TB, D)
    cmd_out = cmdout_ref[...]                                 # (TB, L, D)
    neg     = (mask_ref[...] - 1.0) * 1e30                    # (TB, L, 1): 0 valid / -1e30 pad
    w3h = jnp.maximum(mm(cmd_h, w3) + b3row, 0.0)             # relu(W3 cmd_h + b3)

    for t in range(T_ITERS):
        # ---- extract_textual_command (tiny; VPU/XLU reductions, keep MXU free) ----
        key   = mm(w3h, wsq_ref[2 + t])                       # (TB, D)
        gated = cmd_out * key[:, None, :]                     # (TB, L, D)
        raw   = jnp.sum(gated * w1row[None, :, :], axis=-1, keepdims=True) + neg  # (TB, L, 1)
        # NOTE: if cmdLength==0 for an example, att becomes uniform (same as ref).
        raw   = raw - jnp.max(raw, axis=1, keepdims=True)     # masked softmax over L
        ex    = jnp.exp(raw)
        att   = ex / jnp.sum(ex, axis=1, keepdims=True)       # (TB, L, 1)
        cmd   = jnp.sum(att * cmd_out, axis=1, keepdims=True).reshape(TB, D_CMD)

        # ---- graph_nn on the flattened (TB*N, D) node table ----
        fuse = mm(x_loc, w4) * mm(x_ctx, w5)                  # (M, D)
        # cat = [h, ctx, fuse]; cat @ [W7^T|W9^T|W6^T] via K-split (no concat)
        cat_out = (mm(x_loc, wcat[0:D_CTX, :]) +
                   mm(x_ctx, wcat[D_CTX:2 * D_CTX, :]) +
                   mm(fuse,  wcat[2 * D_CTX:3 * D_CTX, :]))   # (M, 3D) = [srcA|ftA|dst]
        sg    = mm(cmd, wsg)                                  # (TB, 2D) = [cmd@W8^T | cmd@W10^T]
        gates = cat_out[:, 0:2 * D_H].reshape(TB, N, 2 * D_H) * sg[:, None, :]
        dst   = cat_out[:, 2 * D_H:3 * D_H].reshape(TB, N, D_H)
        src   = gates[..., 0:D_H]                             # (TB, N, D)
        ft    = gates[..., D_H:2 * D_H]                       # (TB, N, D)

        # edge u->v: e[v,u] = <src[u], dst[v]>; edge_softmax over incoming u per v
        s_parts = []
        for g in range(TB):                                   # static unroll, per-graph
            e = jax.lax.dot_general(dst[g].astype(BF16), src[g].astype(BF16),
                                    (((1,), (1,)), ((), ())),
                                    preferred_element_type=F32)        # (N, N)
            e = e - jnp.max(e, axis=-1, keepdims=True)
            ee = jnp.exp(e)
            a = ee / jnp.sum(ee, axis=-1, keepdims=True)
            s_parts.append(mm(a, ft[g]))                      # (N, D)
        s = s_parts[0] if TB == 1 else jnp.concatenate(s_parts, axis=0)  # (M, D)

        # ctx <- W11(ctx) + W11b(s)
        x_ctx = mm(x_ctx, w11[0:D_CTX, :]) + mm(s, w11[D_CTX:2 * D_CTX, :])

    # ---- x_out = W12([x_loc, x_ctx])  (K-split, no concat) ----
    x_out = mm(x_loc, w12[0:D_CTX, :]) + mm(x_ctx, w12[D_CTX:2 * D_CTX, :])
    out_ref[...] = x_out.reshape(TB, N, D_H).astype(out_ref.dtype)


# --------------------------------- wrapper -------------------------------------
def _const_spec(shape):
    n = len(shape)
    return pl.BlockSpec(shape, lambda b, _n=n: (0,) * _n)


def _pick_tb(B):
    # Batch graphs per block to raise MXU row occupancy, but keep >= 2 grid
    # points when possible so v7x's two TensorCores both get work.
    if B <= 2:
        return 1
    for tb in (8, 4, 2):
        if B % tb == 0 and B // tb >= 2:
            return tb
    return 1


def lgcn_forward(params, situation_x, cmd_h, cmd_out, cmd_length, tb=None):
    B, N, d_x = situation_x.shape
    L = cmd_out.shape[1]
    if tb is None:
        tb = _pick_tb(B)
    assert B % tb == 0

    # ---- glue: host-side weight packing; MXU operands pre-cast to bf16 ----
    wsq = jnp.stack(
        [params["Wx"].T, params["W3"].T]
        + [params["W2"][t].T for t in range(T_ITERS)]
        + [params["W4"].T, params["W5"].T], axis=0).astype(BF16)              # (4+T, 64, 64)
    wcat = jnp.concatenate(
        [params["W7"].T, params["W9"].T, params["W6"].T], axis=1).astype(BF16)  # (192, 192)
    wsg = jnp.concatenate(
        [params["W8"].T, params["W10"].T], axis=1).astype(BF16)                 # (64, 128)
    wug = jnp.stack(
        [jnp.concatenate([params["W11"].T, params["W11b"].T], axis=0),
         params["W12"].T], axis=0).astype(BF16)                                 # (2, 128, 64)
    wmisc = jnp.concatenate(
        [params["W1"].reshape(1, D_CMD),
         params["b3"].reshape(1, D_CMD),
         params["initMem"].reshape(1, D_CTX)], axis=0).astype(F32)              # (3, 64)

    mask3  = (jnp.arange(L)[None, :] < cmd_length[:, None]).astype(F32).reshape(B, L, 1)
    cmd_h3 = cmd_h.reshape(B, 1, D_CMD).astype(F32)

    x_out = pl.pallas_call(
        _lgcn_kernel,
        out_shape=jax.ShapeDtypeStruct((B, N, D_H), F32),
        grid=(B // tb,),
        in_specs=[
            pl.BlockSpec((tb, N, d_x),   lambda b: (b, 0, 0)),   # situation_x (bf16)
            pl.BlockSpec((tb, 1, D_CMD), lambda b: (b, 0, 0)),   # cmd_h
            pl.BlockSpec((tb, L, D_CMD), lambda b: (b, 0, 0)),   # cmd_out
            pl.BlockSpec((tb, L, 1),     lambda b: (b, 0, 0)),   # sequence mask
            _const_spec((4 + T_ITERS, D_CMD, D_CMD)),            # wsq slab
            _const_spec((3 * D_CTX, 3 * D_H)),                   # wcat slab
            _const_spec((D_S, 2 * D_H)),                         # wsg slab
            _const_spec((2, 2 * D_CTX, D_CTX)),                  # wug slab
            _const_spec((3, D_CMD)),                             # [W1; b3; initMem]
        ],
        out_specs=pl.BlockSpec((tb, N, D_H), lambda b: (b, 0, 0)),
        compiler_params=pltpu.CompilerParams(dimension_semantics=("parallel",)),
    )(situation_x.astype(BF16), cmd_h3, cmd_out.astype(F32), mask3,
      wsq, wcat, wsg, wug, wmisc)

    # TODO(synk): dgl.unbatch returns a per-graph list; we return the stacked
    # (B, N, D) array (split on host with [x_out[b] for b in range(B)] if needed).
    return x_out


# --------------------------- pure-JAX reference (check) -------------------------
def lgcn_reference(params, situation_x, cmd_h, cmd_out, cmd_length):
    def mmT(x, w):  # x @ w.T with bf16 operands, f32 accumulation (matches kernel)
        return jnp.matmul(x.astype(BF16), w.T.astype(BF16), preferred_element_type=F32)

    B, N, _ = situation_x.shape
    L = cmd_out.shape[1]
    x_loc = mmT(situation_x, params["Wx"])
    x_ctx = jnp.broadcast_to(params["initMem"].reshape(1, 1, D_CTX), (B, N, D_CTX)).astype(F32)
    mask = (jnp.arange(L)[None, :] < cmd_length[:, None]).astype(F32)
    w3h = jax.nn.relu(mmT(cmd_h, params["W3"]) + params["b3"])
    for t in range(T_ITERS):
        key = mmT(w3h, params["W2"][t])
        raw = jnp.sum((cmd_out * key[:, None, :]) * params["W1"][0][None, None, :], axis=-1)
        att = jax.nn.softmax(raw + (mask - 1.0) * 1e30, axis=-1)
        cmd = jnp.sum(att[:, :, None] * cmd_out, axis=1)

        fuse = mmT(x_loc, params["W4"]) * mmT(x_ctx, params["W5"])
        cat = jnp.concatenate([x_loc, x_ctx, fuse], axis=-1)
        src = mmT(cat, params["W7"]) * mmT(cmd, params["W8"])[:, None, :]
        dst = mmT(cat, params["W6"])
        e = jnp.einsum("bvd,bud->bvu", dst.astype(BF16), src.astype(BF16),
                       preferred_element_type=F32)
        a = jax.nn.softmax(e, axis=-1)
        ft = mmT(cat, params["W9"]) * mmT(cmd, params["W10"])[:, None, :]
        s = jnp.einsum("bvu,bud->bvd", a.astype(BF16), ft.astype(BF16),
                       preferred_element_type=F32)
        x_ctx = mmT(x_ctx, params["W11"]) + mmT(s, params["W11b"])
    return mmT(jnp.concatenate([x_loc, x_ctx], axis=-1), params["W12"])


# ----------------------------------- main ---------------------------------------
def _make_params(key):
    def lin(k, out_d, in_d):
        return (jax.random.normal(k, (out_d, in_d), F32) / np.sqrt(in_d)).astype(F32)

    ks = jax.random.split(key, 20)
    d_cat = D_CTX + D_CTX + D_H
    return {
        "Wx":   lin(ks[0], D_CTX, D_X),
        "W1":   lin(ks[1], 1, D_CMD),
        "W2":   [lin(ks[2 + t], D_CMD, D_CMD) for t in range(T_ITERS)],
        "W3":   lin(ks[5], D_CMD, D_CMD),
        "b3":   jnp.zeros((D_CMD,), F32) + 0.01,
        "W4":   lin(ks[6], D_H, D_CTX),
        "W5":   lin(ks[7], D_H, D_CTX),
        "W6":   lin(ks[8], D_H, d_cat),
        "W7":   lin(ks[9], D_H, d_cat),
        "W8":   lin(ks[10], D_H, D_S),
        "W9":   lin(ks[11], D_M, d_cat),
        "W10":  lin(ks[12], D_M, D_S),
        "W11":  lin(ks[13], D_CTX, D_CTX),
        "W11b": lin(ks[14], D_CTX, D_M),
        "W12":  lin(ks[15], D_H, 2 * D_CTX),
        "initMem": jax.random.normal(ks[16], (1, D_CTX), F32),
    }


if __name__ == "__main__":
    B, N, L = 2, 16, 8
    key = jax.random.PRNGKey(0)
    k_p, k_x, k_ch, k_co = jax.random.split(key, 4)

    params = _make_params(k_p)
    situation_x = jax.random.normal(k_x, (B, N, D_X), F32)
    cmd_h = jax.random.normal(k_ch, (B, D_CMD), F32)
    cmd_out = jax.random.normal(k_co, (B, L, D_CMD), F32)
    cmd_length = jnp.array([L, 5], dtype=jnp.int32)

    fwd = jax.jit(lgcn_forward)
    out = jax.block_until_ready(fwd(params, situation_x, cmd_h, cmd_out, cmd_length))

    ref = jax.block_until_ready(
        lgcn_reference(params, situation_x, cmd_h, cmd_out, cmd_length))
    np.testing.assert_allclose(np.asarray(out), np.asarray(ref), rtol=2e-2, atol=2e-2)

    # TODO(synk): train-mode Dropout (x_loc_drop / read_drop) is omitted (inference).
    print("KERNEL_OK")
</pallas_src>

<mosaic_0001>
module attributes {stable_mosaic.version = 11 : i64} {
  func.func @_lgcn_kernel(%arg0: i32, %arg1: memref<1x16x64xbf16, #tpu.memory_space<vmem>>, %arg2: memref<1x1x64xf32, #tpu.memory_space<vmem>>, %arg3: memref<1x8x64xf32, #tpu.memory_space<vmem>>, %arg4: memref<1x8x1xf32, #tpu.memory_space<vmem>>, %arg5: memref<6x64x64xbf16, #tpu.memory_space<vmem>>, %arg6: memref<192x192xbf16, #tpu.memory_space<vmem>>, %arg7: memref<64x128xbf16, #tpu.memory_space<vmem>>, %arg8: memref<2x128x64xbf16, #tpu.memory_space<vmem>>, %arg9: memref<3x64xf32, #tpu.memory_space<vmem>>, %arg10: memref<1x16x64xf32, #tpu.memory_space<vmem>>) attributes {dimension_semantics = [#tpu.dimension_semantics<parallel>], iteration_bounds = array<i64: 2>, scalar_prefetch = 0 : i64, scratch_operands = 0 : i64, tpu.core_type = #tpu.core_type<tc>, window_params = [{transform_indices = @transform_0, window_bounds = array<i64: 1, 16, 64>}, {transform_indices = @transform_1, window_bounds = array<i64: 1, 1, 64>}, {transform_indices = @transform_2, window_bounds = array<i64: 1, 8, 64>}, {transform_indices = @transform_3, window_bounds = array<i64: 1, 8, 1>}, {pipeline_mode = #tpu.pipeline_mode<synchronous>, transform_indices = @transform_4, window_bounds = array<i64: 6, 64, 64>}, {pipeline_mode = #tpu.pipeline_mode<synchronous>, transform_indices = @transform_5, window_bounds = array<i64: 192, 192>}, {pipeline_mode = #tpu.pipeline_mode<synchronous>, transform_indices = @transform_6, window_bounds = array<i64: 64, 128>}, {pipeline_mode = #tpu.pipeline_mode<synchronous>, transform_indices = @transform_7, window_bounds = array<i64: 2, 128, 64>}, {pipeline_mode = #tpu.pipeline_mode<synchronous>, transform_indices = @transform_8, window_bounds = array<i64: 3, 64>}, {transform_indices = @transform_9, window_bounds = array<i64: 1, 16, 64>}]} {
    %c0 = arith.constant 0 : index
    %c0_0 = arith.constant 0 : index
    %c0_1 = arith.constant 0 : index
    %0 = vector.load %arg5[%c0, %c0_0, %c0_1] : memref<6x64x64xbf16, #tpu.memory_space<vmem>>, vector<1x64x64xbf16>
    %1 = vector.shape_cast %0 : vector<1x64x64xbf16> to vector<64x64xbf16>
    %c1 = arith.constant 1 : index
    %c0_2 = arith.constant 0 : index
    %c0_3 = arith.constant 0 : index
    %2 = vector.load %arg5[%c1, %c0_2, %c0_3] : memref<6x64x64xbf16, #tpu.memory_space<vmem>>, vector<1x64x64xbf16>
    %3 = vector.shape_cast %2 : vector<1x64x64xbf16> to vector<64x64xbf16>
    %c4 = arith.constant 4 : index
    %c0_4 = arith.constant 0 : index
    %c0_5 = arith.constant 0 : index
    %4 = vector.load %arg5[%c4, %c0_4, %c0_5] : memref<6x64x64xbf16, #tpu.memory_space<vmem>>, vector<1x64x64xbf16>
    %5 = vector.shape_cast %4 : vector<1x64x64xbf16> to vector<64x64xbf16>
    %c5 = arith.constant 5 : index
    %c0_6 = arith.constant 0 : index
    %c0_7 = arith.constant 0 : index
    %6 = vector.load %arg5[%c5, %c0_6, %c0_7] : memref<6x64x64xbf16, #tpu.memory_space<vmem>>, vector<1x64x64xbf16>
    %7 = vector.shape_cast %6 : vector<1x64x64xbf16> to vector<64x64xbf16>
    %c0_8 = arith.constant 0 : index
    %c0_9 = arith.constant 0 : index
    %8 = vector.load %arg6[%c0_8, %c0_9] : memref<192x192xbf16, #tpu.memory_space<vmem>>, vector<192x192xbf16>
    %c0_10 = arith.constant 0 : index
    %c0_11 = arith.constant 0 : index
    %9 = vector.load %arg7[%c0_10, %c0_11] : memref<64x128xbf16, #tpu.memory_space<vmem>>, vector<64x128xbf16>
    %c0_12 = arith.constant 0 : index
    %c0_13 = arith.constant 0 : index
    %c0_14 = arith.constant 0 : index
    %10 = vector.load %arg8[%c0_12, %c0_13, %c0_14] : memref<2x128x64xbf16, #tpu.memory_space<vmem>>, vector<1x128x64xbf16>
    %11 = vector.shape_cast %10 : vector<1x128x64xbf16> to vector<128x64xbf16>
    %c1_15 = arith.constant 1 : index
    %c0_16 = arith.constant 0 : index
    %c0_17 = arith.constant 0 : index
    %12 = vector.load %arg8[%c1_15, %c0_16, %c0_17] : memref<2x128x64xbf16, #tpu.memory_space<vmem>>, vector<1x128x64xbf16>
    %13 = vector.shape_cast %12 : vector<1x128x64xbf16> to vector<128x64xbf16>
    %c0_18 = arith.constant 0 : index
    %c0_19 = arith.constant 0 : index
    %14 = vector.load %arg9[%c0_18, %c0_19] : memref<3x64xf32, #tpu.memory_space<vmem>>, vector<1x64xf32>
    %c1_20 = arith.constant 1 : index
    %c0_21 = arith.constant 0 : index
    %15 = vector.load %arg9[%c1_20, %c0_21] : memref<3x64xf32, #tpu.memory_space<vmem>>, vector<1x64xf32>
    %c2 = arith.constant 2 : index
    %c0_22 = arith.constant 0 : index
    %16 = vector.load %arg9[%c2, %c0_22] : memref<3x64xf32, #tpu.memory_space<vmem>>, vector<1x64xf32>
    %c0_23 = arith.constant 0 : index
    %c0_24 = arith.constant 0 : index
    %c0_25 = arith.constant 0 : index
    %17 = vector.load %arg1[%c0_23, %c0_24, %c0_25] : memref<1x16x64xbf16, #tpu.memory_space<vmem>>, vector<1x16x64xbf16>
    %18 = vector.shape_cast %17 : vector<1x16x64xbf16> to vector<16x64xbf16>
    %cst = arith.constant dense<0.000000e+00> : vector<16x64xf32>
    %19 = tpu.matmul %18, %1, %cst {dimension_numbers = #tpu.dot_dimension_numbers<[1], [0], [0], [1], [0, 0, 1, 1], [], []>} : vector<16x64xbf16>, vector<64x64xbf16>, vector<16x64xf32> -> vector<16x64xf32>
    %20 = vector.shape_cast %16 : vector<1x64xf32> to vector<1x64xf32>
    %21 = vector.broadcast %20 : vector<1x64xf32> to vector<16x64xf32>
    %c0_26 = arith.constant 0 : index
    %c0_27 = arith.constant 0 : index
    %c0_28 = arith.constant 0 : index
    %22 = vector.load %arg2[%c0_26, %c0_27, %c0_28] : memref<1x1x64xf32, #tpu.memory_space<vmem>>, vector<1x1x64xf32>
    %23 = vector.shape_cast %22 : vector<1x1x64xf32> to vector<1x64xf32>
    %c0_29 = arith.constant 0 : index
    %c0_30 = arith.constant 0 : index
    %c0_31 = arith.constant 0 : index
    %24 = vector.load %arg3[%c0_29, %c0_30, %c0_31] : memref<1x8x64xf32, #tpu.memory_space<vmem>>, vector<1x8x64xf32>
    %c0_32 = arith.constant 0 : index
    %c0_33 = arith.constant 0 : index
    %c0_34 = arith.constant 0 : index
    %25 = vector.load %arg4[%c0_32, %c0_33, %c0_34] : memref<1x8x1xf32, #tpu.memory_space<vmem>>, vector<1x8x1xf32>
    %cst_35 = arith.constant 1.000000e+00 : f32
    %26 = vector.broadcast %cst_35 : f32 to vector<1x8x1xf32>
    %27 = arith.subf %25, %26 : vector<1x8x1xf32>
    %cst_36 = arith.constant 1.000000e+30 : f32
    %28 = vector.broadcast %cst_36 : f32 to vector<1x8x1xf32>
    %29 = arith.mulf %27, %28 : vector<1x8x1xf32>
    %30 = arith.truncf %23 : vector<1x64xf32> to vector<1x64xbf16>
    %cst_37 = arith.constant dense<0.000000e+00> : vector<1x64xf32>
    %31 = tpu.matmul %30, %3, %cst_37 {dimension_numbers = #tpu.dot_dimension_numbers<[1], [0], [0], [1], [0, 0, 1, 1], [], []>} : vector<1x64xbf16>, vector<64x64xbf16>, vector<1x64xf32> -> vector<1x64xf32>
    %32 = arith.addf %31, %15 : vector<1x64xf32>
    %cst_38 = arith.constant 0.000000e+00 : f32
    %33 = vector.broadcast %cst_38 : f32 to vector<1x64xf32>
    %34 = arith.maximumf %32, %33 : vector<1x64xf32>
    %c2_39 = arith.constant 2 : index
    %c0_40 = arith.constant 0 : index
    %c0_41 = arith.constant 0 : index
    %35 = vector.load %arg5[%c2_39, %c0_40, %c0_41] : memref<6x64x64xbf16, #tpu.memory_space<vmem>>, vector<1x64x64xbf16>
    %36 = vector.shape_cast %35 : vector<1x64x64xbf16> to vector<64x64xbf16>
    %37 = arith.truncf %34 : vector<1x64xf32> to vector<1x64xbf16>
    %cst_42 = arith.constant dense<0.000000e+00> : vector<1x64xf32>
    %38 = tpu.matmul %37, %36, %cst_42 {dimension_numbers = #tpu.dot_dimension_numbers<[1], [0], [0], [1], [0, 0, 1, 1], [], []>} : vector<1x64xbf16>, vector<64x64xbf16>, vector<1x64xf32> -> vector<1x64xf32>
    %39 = vector.shape_cast %38 : vector<1x64xf32> to vector<1x1x64xf32>
    %40 = vector.broadcast %39 : vector<1x1x64xf32> to vector<1x8x64xf32>
    %41 = arith.mulf %24, %40 : vector<1x8x64xf32>
    %42 = vector.shape_cast %14 : vector<1x64xf32> to vector<1x1x64xf32>
    %43 = vector.broadcast %42 : vector<1x1x64xf32> to vector<1x8x64xf32>
    %44 = arith.mulf %41, %43 : vector<1x8x64xf32>
    %cst_43 = arith.constant dense<0.000000e+00> : vector<1x8xf32>
    %45 = vector.multi_reduction <add>, %44, %cst_43 [2] : vector<1x8x64xf32> to vector<1x8xf32>
    %46 = vector.shape_cast %45 : vector<1x8xf32> to vector<1x8x1xf32>
    %47 = arith.addf %46, %29 : vector<1x8x1xf32>
    %cst_44 = arith.constant dense<0xFF800000> : vector<1x1xf32>
    %48 = vector.multi_reduction <maximumf>, %47, %cst_44 [1] : vector<1x8x1xf32> to vector<1x1xf32>
    %49 = vector.shape_cast %48 : vector<1x1xf32> to vector<1x1x1xf32>
    %50 = vector.broadcast %49 : vector<1x1x1xf32> to vector<1x8x1xf32>
    %51 = arith.subf %47, %50 : vector<1x8x1xf32>
    %52 = math.exp %51 : vector<1x8x1xf32>
    %cst_45 = arith.constant dense<0.000000e+00> : vector<1x1xf32>
    %53 = vector.multi_reduction <add>, %52, %cst_45 [1] : vector<1x8x1xf32> to vector<1x1xf32>
    %54 = vector.shape_cast %53 : vector<1x1xf32> to vector<1x1x1xf32>
    %55 = vector.broadcast %54 : vector<1x1x1xf32> to vector<1x8x1xf32>
    %56 = arith.divf %52, %55 : vector<1x8x1xf32>
    %57 = vector.broadcast %56 : vector<1x8x1xf32> to vector<1x8x64xf32>
    %58 = arith.mulf %57, %24 : vector<1x8x64xf32>
    %cst_46 = arith.constant dense<0.000000e+00> : vector<1x64xf32>
    %59 = vector.multi_reduction <add>, %58, %cst_46 [1] : vector<1x8x64xf32> to vector<1x64xf32>
    %60 = vector.shape_cast %59 : vector<1x64xf32> to vector<1x1x64xf32>
    %61 = vector.shape_cast %60 : vector<1x1x64xf32> to vector<1x64xf32>
    %62 = arith.truncf %19 : vector<16x64xf32> to vector<16x64xbf16>
    %cst_47 = arith.constant dense<0.000000e+00> : vector<16x64xf32>
    %63 = tpu.matmul %62, %5, %cst_47 {dimension_numbers = #tpu.dot_dimension_numbers<[1], [0], [0], [1], [0, 0, 1, 1], [], []>} : vector<16x64xbf16>, vector<64x64xbf16>, vector<16x64xf32> -> vector<16x64xf32>
    %64 = arith.truncf %21 : vector<16x64xf32> to vector<16x64xbf16>
    %cst_48 = arith.constant dense<0.000000e+00> : vector<16x64xf32>
    %65 = tpu.matmul %64, %7, %cst_48 {dimension_numbers = #tpu.dot_dimension_numbers<[1], [0], [0], [1], [0, 0, 1, 1], [], []>} : vector<16x64xbf16>, vector<64x64xbf16>, vector<16x64xf32> -> vector<16x64xf32>
    %66 = arith.mulf %63, %65 : vector<16x64xf32>
    %67 = vector.extract_strided_slice %8 {offsets = [0, 0], sizes = [64, 192], strides = [1, 1]} : vector<192x192xbf16> to vector<64x192xbf16>
    %68 = arith.truncf %19 : vector<16x64xf32> to vector<16x64xbf16>
    %cst_49 = arith.constant dense<0.000000e+00> : vector<16x192xf32>
    %69 = tpu.matmul %68, %67, %cst_49 {dimension_numbers = #tpu.dot_dimension_numbers<[1], [0], [0], [1], [0, 0, 1, 1], [], []>} : vector<16x64xbf16>, vector<64x192xbf16>, vector<16x192xf32> -> vector<16x192xf32>
    %70 = vector.extract_strided_slice %8 {offsets = [64, 0], sizes = [64, 192], strides = [1, 1]} : vector<192x192xbf16> to vector<64x192xbf16>
    %71 = arith.truncf %21 : vector<16x64xf32> to vector<16x64xbf16>
    %cst_50 = arith.constant dense<0.000000e+00> : vector<16x192xf32>
    %72 = tpu.matmul %71, %70, %cst_50 {dimension_numbers = #tpu.dot_dimension_numbers<[1], [0], [0], [1], [0, 0, 1, 1], [], []>} : vector<16x64xbf16>, vector<64x192xbf16>, vector<16x192xf32> -> vector<16x192xf32>
    %73 = arith.addf %69, %72 : vector<16x192xf32>
    %74 = vector.extract_strided_slice %8 {offsets = [128, 0], sizes = [64, 192], strides = [1, 1]} : vector<192x192xbf16> to vector<64x192xbf16>
    %75 = arith.truncf %66 : vector<16x64xf32> to vector<16x64xbf16>
    %cst_51 = arith.constant dense<0.000000e+00> : vector<16x192xf32>
    %76 = tpu.matmul %75, %74, %cst_51 {dimension_numbers = #tpu.dot_dimension_numbers<[1], [0], [0], [1], [0, 0, 1, 1], [], []>} : vector<16x64xbf16>, vector<64x192xbf16>, vector<16x192xf32> -> vector<16x192xf32>
    %77 = arith.addf %73, %76 : vector<16x192xf32>
    %78 = arith.truncf %61 : vector<1x64xf32> to vector<1x64xbf16>
    %cst_52 = arith.constant dense<0.000000e+00> : vector<1x128xf32>
    %79 = tpu.matmul %78, %9, %cst_52 {dimension_numbers = #tpu.dot_dimension_numbers<[1], [0], [0], [1], [0, 0, 1, 1], [], []>} : vector<1x64xbf16>, vector<64x128xbf16>, vector<1x128xf32> -> vector<1x128xf32>
    %80 = vector.extract_strided_slice %77 {offsets = [0, 0], sizes = [16, 128], strides = [1, 1]} : vector<16x192xf32> to vector<16x128xf32>
    %81 = vector.shape_cast %80 : vector<16x128xf32> to vector<1x16x128xf32>
    %82 = vector.shape_cast %79 : vector<1x128xf32> to vector<1x1x128xf32>
    %83 = vector.broadcast %82 : vector<1x1x128xf32> to vector<1x16x128xf32>
    %84 = arith.mulf %81, %83 : vector<1x16x128xf32>
    %85 = vector.extract_strided_slice %77 {offsets = [0, 128], sizes = [16, 64], strides = [1, 1]} : vector<16x192xf32> to vector<16x64xf32>
    %86 = vector.shape_cast %85 : vector<16x64xf32> to vector<1x16x64xf32>
    %87 = vector.extract_strided_slice %84 {offsets = [0, 0, 0], sizes = [1, 16, 64], strides = [1, 1, 1]} : vector<1x16x128xf32> to vector<1x16x64xf32>
    %88 = vector.extract_strided_slice %84 {offsets = [0, 0, 64], sizes = [1, 16, 64], strides = [1, 1, 1]} : vector<1x16x128xf32> to vector<1x16x64xf32>
    %89 = vector.shape_cast %86 : vector<1x16x64xf32> to vector<16x64xf32>
    %90 = arith.truncf %89 : vector<16x64xf32> to vector<16x64xbf16>
    %91 = vector.shape_cast %87 : vector<1x16x64xf32> to vector<16x64xf32>
    %92 = arith.truncf %91 : vector<16x64xf32> to vector<16x64xbf16>
    %cst_53 = arith.constant dense<0.000000e+00> : vector<16x16xf32>
    %93 = tpu.matmul %90, %92, %cst_53 {dimension_numbers = #tpu.dot_dimension_numbers<[1], [1], [0], [0], [0, 0, 1, 0], [], []>} : vector<16x64xbf16>, vector<16x64xbf16>, vector<16x16xf32> -> vector<16x16xf32>
    %cst_54 = arith.constant dense<0xFF800000> : vector<16xf32>
    %94 = vector.multi_reduction <maximumf>, %93, %cst_54 [1] : vector<16x16xf32> to vector<16xf32>
    %95 = vector.shape_cast %94 : vector<16xf32> to vector<16x1xf32>
    %96 = vector.broadcast %95 : vector<16x1xf32> to vector<16x16xf32>
    %97 = arith.subf %93, %96 : vector<16x16xf32>
    %98 = math.exp %97 : vector<16x16xf32>
    %cst_55 = arith.constant dense<0.000000e+00> : vector<16xf32>
    %99 = vector.multi_reduction <add>, %98, %cst_55 [1] : vector<16x16xf32> to vector<16xf32>
    %100 = vector.shape_cast %99 : vector<16xf32> to vector<16x1xf32>
    %101 = vector.broadcast %100 : vector<16x1xf32> to vector<16x16xf32>
    %102 = arith.divf %98, %101 : vector<16x16xf32>
    %103 = vector.shape_cast %88 : vector<1x16x64xf32> to vector<16x64xf32>
    %104 = arith.truncf %102 : vector<16x16xf32> to vector<16x16xbf16>
    %105 = arith.truncf %103 : vector<16x64xf32> to vector<16x64xbf16>
    %cst_56 = arith.constant dense<0.000000e+00> : vector<16x64xf32>
    %106 = tpu.matmul %104, %105, %cst_56 {dimension_numbers = #tpu.dot_dimension_numbers<[1], [0], [0], [1], [0, 0, 1, 1], [], []>} : vector<16x16xbf16>, vector<16x64xbf16>, vector<16x64xf32> -> vector<16x64xf32>
    %107 = vector.extract_strided_slice %11 {offsets = [0, 0], sizes = [64, 64], strides = [1, 1]} : vector<128x64xbf16> to vector<64x64xbf16>
    %108 = arith.truncf %21 : vector<16x64xf32> to vector<16x64xbf16>
    %cst_57 = arith.constant dense<0.000000e+00> : vector<16x64xf32>
    %109 = tpu.matmul %108, %107, %cst_57 {dimension_numbers = #tpu.dot_dimension_numbers<[1], [0], [0], [1], [0, 0, 1, 1], [], []>} : vector<16x64xbf16>, vector<64x64xbf16>, vector<16x64xf32> -> vector<16x64xf32>
    %110 = vector.extract_strided_slice %11 {offsets = [64, 0], sizes = [64, 64], strides = [1, 1]} : vector<128x64xbf16> to vector<64x64xbf16>
    %111 = arith.truncf %106 : vector<16x64xf32> to vector<16x64xbf16>
    %cst_58 = arith.constant dense<0.000000e+00> : vector<16x64xf32>
    %112 = tpu.matmul %111, %110, %cst_58 {dimension_numbers = #tpu.dot_dimension_numbers<[1], [0], [0], [1], [0, 0, 1, 1], [], []>} : vector<16x64xbf16>, vector<64x64xbf16>, vector<16x64xf32> -> vector<16x64xf32>
    %113 = arith.addf %109, %112 : vector<16x64xf32>
    %c3 = arith.constant 3 : index
    %c0_59 = arith.constant 0 : index
    %c0_60 = arith.constant 0 : index
    %114 = vector.load %arg5[%c3, %c0_59, %c0_60] : memref<6x64x64xbf16, #tpu.memory_space<vmem>>, vector<1x64x64xbf16>
    %115 = vector.shape_cast %114 : vector<1x64x64xbf16> to vector<64x64xbf16>
    %116 = arith.truncf %34 : vector<1x64xf32> to vector<1x64xbf16>
    %cst_61 = arith.constant dense<0.000000e+00> : vector<1x64xf32>
    %117 = tpu.matmul %116, %115, %cst_61 {dimension_numbers = #tpu.dot_dimension_numbers<[1], [0], [0], [1], [0, 0, 1, 1], [], []>} : vector<1x64xbf16>, vector<64x64xbf16>, vector<1x64xf32> -> vector<1x64xf32>
    %118 = vector.shape_cast %117 : vector<1x64xf32> to vector<1x1x64xf32>
    %119 = vector.broadcast %118 : vector<1x1x64xf32> to vector<1x8x64xf32>
    %120 = arith.mulf %24, %119 : vector<1x8x64xf32>
    %121 = vector.shape_cast %14 : vector<1x64xf32> to vector<1x1x64xf32>
    %122 = vector.broadcast %121 : vector<1x1x64xf32> to vector<1x8x64xf32>
    %123 = arith.mulf %120, %122 : vector<1x8x64xf32>
    %cst_62 = arith.constant dense<0.000000e+00> : vector<1x8xf32>
    %124 = vector.multi_reduction <add>, %123, %cst_62 [2] : vector<1x8x64xf32> to vector<1x8xf32>
    %125 = vector.shape_cast %124 : vector<1x8xf32> to vector<1x8x1xf32>
    %126 = arith.addf %125, %29 : vector<1x8x1xf32>
    %cst_63 = arith.constant dense<0xFF800000> : vector<1x1xf32>
    %127 = vector.multi_reduction <maximumf>, %126, %cst_63 [1] : vector<1x8x1xf32> to vector<1x1xf32>
    %128 = vector.shape_cast %127 : vector<1x1xf32> to vector<1x1x1xf32>
    %129 = vector.broadcast %128 : vector<1x1x1xf32> to vector<1x8x1xf32>
    %130 = arith.subf %126, %129 : vector<1x8x1xf32>
    %131 = math.exp %130 : vector<1x8x1xf32>
    %cst_64 = arith.constant dense<0.000000e+00> : vector<1x1xf32>
    %132 = vector.multi_reduction <add>, %131, %cst_64 [1] : vector<1x8x1xf32> to vector<1x1xf32>
    %133 = vector.shape_cast %132 : vector<1x1xf32> to vector<1x1x1xf32>
    %134 = vector.broadcast %133 : vector<1x1x1xf32> to vector<1x8x1xf32>
    %135 = arith.divf %131, %134 : vector<1x8x1xf32>
    %136 = vector.broadcast %135 : vector<1x8x1xf32> to vector<1x8x64xf32>
    %137 = arith.mulf %136, %24 : vector<1x8x64xf32>
    %cst_65 = arith.constant dense<0.000000e+00> : vector<1x64xf32>
    %138 = vector.multi_reduction <add>, %137, %cst_65 [1] : vector<1x8x64xf32> to vector<1x64xf32>
    %139 = vector.shape_cast %138 : vector<1x64xf32> to vector<1x1x64xf32>
    %140 = vector.shape_cast %139 : vector<1x1x64xf32> to vector<1x64xf32>
    %141 = arith.truncf %19 : vector<16x64xf32> to vector<16x64xbf16>
    %cst_66 = arith.constant dense<0.000000e+00> : vector<16x64xf32>
    %142 = tpu.matmul %141, %5, %cst_66 {dimension_numbers = #tpu.dot_dimension_numbers<[1], [0], [0], [1], [0, 0, 1, 1], [], []>} : vector<16x64xbf16>, vector<64x64xbf16>, vector<16x64xf32> -> vector<16x64xf32>
    %143 = arith.truncf %113 : vector<16x64xf32> to vector<16x64xbf16>
    %cst_67 = arith.constant dense<0.000000e+00> : vector<16x64xf32>
    %144 = tpu.matmul %143, %7, %cst_67 {dimension_numbers = #tpu.dot_dimension_numbers<[1], [0], [0], [1], [0, 0, 1, 1], [], []>} : vector<16x64xbf16>, vector<64x64xbf16>, vector<16x64xf32> -> vector<16x64xf32>
    %145 = arith.mulf %142, %144 : vector<16x64xf32>
    %146 = vector.extract_strided_slice %8 {offsets = [0, 0], sizes = [64, 192], strides = [1, 1]} : vector<192x192xbf16> to vector<64x192xbf16>
    %147 = arith.truncf %19 : vector<16x64xf32> to vector<16x64xbf16>
    %cst_68 = arith.constant dense<0.000000e+00> : vector<16x192xf32>
    %148 = tpu.matmul %147, %146, %cst_68 {dimension_numbers = #tpu.dot_dimension_numbers<[1], [0], [0], [1], [0, 0, 1, 1], [], []>} : vector<16x64xbf16>, vector<64x192xbf16>, vector<16x192xf32> -> vector<16x192xf32>
    %149 = vector.extract_strided_slice %8 {offsets = [64, 0], sizes = [64, 192], strides = [1, 1]} : vector<192x192xbf16> to vector<64x192xbf16>
    %150 = arith.truncf %113 : vector<16x64xf32> to vector<16x64xbf16>
    %cst_69 = arith.constant dense<0.000000e+00> : vector<16x192xf32>
    %151 = tpu.matmul %150, %149, %cst_69 {dimension_numbers = #tpu.dot_dimension_numbers<[1], [0], [0], [1], [0, 0, 1, 1], [], []>} : vector<16x64xbf16>, vector<64x192xbf16>, vector<16x192xf32> -> vector<16x192xf32>
    %152 = arith.addf %148, %151 : vector<16x192xf32>
    %153 = vector.extract_strided_slice %8 {offsets = [128, 0], sizes = [64, 192], strides = [1, 1]} : vector<192x192xbf16> to vector<64x192xbf16>
    %154 = arith.truncf %145 : vector<16x64xf32> to vector<16x64xbf16>
    %cst_70 = arith.constant dense<0.000000e+00> : vector<16x192xf32>
    %155 = tpu.matmul %154, %153, %cst_70 {dimension_numbers = #tpu.dot_dimension_numbers<[1], [0], [0], [1], [0, 0, 1, 1], [], []>} : vector<16x64xbf16>, vector<64x192xbf16>, vector<16x192xf32> -> vector<16x192xf32>
    %156 = arith.addf %152, %155 : vector<16x192xf32>
    %157 = arith.truncf %140 : vector<1x64xf32> to vector<1x64xbf16>
    %cst_71 = arith.constant dense<0.000000e+00> : vector<1x128xf32>
    %158 = tpu.matmul %157, %9, %cst_71 {dimension_numbers = #tpu.dot_dimension_numbers<[1], [0], [0], [1], [0, 0, 1, 1], [], []>} : vector<1x64xbf16>, vector<64x128xbf16>, vector<1x128xf32> -> vector<1x128xf32>
    %159 = vector.extract_strided_slice %156 {offsets = [0, 0], sizes = [16, 128], strides = [1, 1]} : vector<16x192xf32> to vector<16x128xf32>
    %160 = vector.shape_cast %159 : vector<16x128xf32> to vector<1x16x128xf32>
    %161 = vector.shape_cast %158 : vector<1x128xf32> to vector<1x1x128xf32>
    %162 = vector.broadcast %161 : vector<1x1x128xf32> to vector<1x16x128xf32>
    %163 = arith.mulf %160, %162 : vector<1x16x128xf32>
    %164 = vector.extract_strided_slice %156 {offsets = [0, 128], sizes = [16, 64], strides = [1, 1]} : vector<16x192xf32> to vector<16x64xf32>
    %165 = vector.shape_cast %164 : vector<16x64xf32> to vector<1x16x64xf32>
    %166 = vector.extract_strided_slice %163 {offsets = [0, 0, 0], sizes = [1, 16, 64], strides = [1, 1, 1]} : vector<1x16x128xf32> to vector<1x16x64xf32>
    %167 = vector.extract_strided_slice %163 {offsets = [0, 0, 64], sizes = [1, 16, 64], strides = [1, 1, 1]} : vector<1x16x128xf32> to vector<1x16x64xf32>
    %168 = vector.shape_cast %165 : vector<1x16x64xf32> to vector<16x64xf32>
    %169 = arith.truncf %168 : vector<16x64xf32> to vector<16x64xbf16>
    %170 = vector.shape_cast %166 : vector<1x16x64xf32> to vector<16x64xf32>
    %171 = arith.truncf %170 : vector<16x64xf32> to vector<16x64xbf16>
    %cst_72 = arith.constant dense<0.000000e+00> : vector<16x16xf32>
    %172 = tpu.matmul %169, %171, %cst_72 {dimension_numbers = #tpu.dot_dimension_numbers<[1], [1], [0], [0], [0, 0, 1, 0], [], []>} : vector<16x64xbf16>, vector<16x64xbf16>, vector<16x16xf32> -> vector<16x16xf32>
    %cst_73 = arith.constant dense<0xFF800000> : vector<16xf32>
    %173 = vector.multi_reduction <maximumf>, %172, %cst_73 [1] : vector<16x16xf32> to vector<16xf32>
    %174 = vector.shape_cast %173 : vector<16xf32> to vector<16x1xf32>
    %175 = vector.broadcast %174 : vector<16x1xf32> to vector<16x16xf32>
    %176 = arith.subf %172, %175 : vector<16x16xf32>
    %177 = math.exp %176 : vector<16x16xf32>
    %cst_74 = arith.constant dense<0.000000e+00> : vector<16xf32>
    %178 = vector.multi_reduction <add>, %177, %cst_74 [1] : vector<16x16xf32> to vector<16xf32>
    %179 = vector.shape_cast %178 : vector<16xf32> to vector<16x1xf32>
    %180 = vector.broadcast %179 : vector<16x1xf32> to vector<16x16xf32>
    %181 = arith.divf %177, %180 : vector<16x16xf32>
    %182 = vector.shape_cast %167 : vector<1x16x64xf32> to vector<16x64xf32>
    %183 = arith.truncf %181 : vector<16x16xf32> to vector<16x16xbf16>
    %184 = arith.truncf %182 : vector<16x64xf32> to vector<16x64xbf16>
    %cst_75 = arith.constant dense<0.000000e+00> : vector<16x64xf32>
    %185 = tpu.matmul %183, %184, %cst_75 {dimension_numbers = #tpu.dot_dimension_numbers<[1], [0], [0], [1], [0, 0, 1, 1], [], []>} : vector<16x16xbf16>, vector<16x64xbf16>, vector<16x64xf32> -> vector<16x64xf32>
    %186 = vector.extract_strided_slice %11 {offsets = [0, 0], sizes = [64, 64], strides = [1, 1]} : vector<128x64xbf16> to vector<64x64xbf16>
    %187 = arith.truncf %113 : vector<16x64xf32> to vector<16x64xbf16>
    %cst_76 = arith.constant dense<0.000000e+00> : vector<16x64xf32>
    %188 = tpu.matmul %187, %186, %cst_76 {dimension_numbers = #tpu.dot_dimension_numbers<[1], [0], [0], [1], [0, 0, 1, 1], [], []>} : vector<16x64xbf16>, vector<64x64xbf16>, vector<16x64xf32> -> vector<16x64xf32>
    %189 = vector.extract_strided_slice %11 {offsets = [64, 0], sizes = [64, 64], strides = [1, 1]} : vector<128x64xbf16> to vector<64x64xbf16>
    %190 = arith.truncf %185 : vector<16x64xf32> to vector<16x64xbf16>
    %cst_77 = arith.constant dense<0.000000e+00> : vector<16x64xf32>
    %191 = tpu.matmul %190, %189, %cst_77 {dimension_numbers = #tpu.dot_dimension_numbers<[1], [0], [0], [1], [0, 0, 1, 1], [], []>} : vector<16x64xbf16>, vector<64x64xbf16>, vector<16x64xf32> -> vector<16x64xf32>
    %192 = arith.addf %188, %191 : vector<16x64xf32>
    %193 = vector.extract_strided_slice %13 {offsets = [0, 0], sizes = [64, 64], strides = [1, 1]} : vector<128x64xbf16> to vector<64x64xbf16>
    %194 = arith.truncf %19 : vector<16x64xf32> to vector<16x64xbf16>
    %cst_78 = arith.constant dense<0.000000e+00> : vector<16x64xf32>
    %195 = tpu.matmul %194, %193, %cst_78 {dimension_numbers = #tpu.dot_dimension_numbers<[1], [0], [0], [1], [0, 0, 1, 1], [], []>} : vector<16x64xbf16>, vector<64x64xbf16>, vector<16x64xf32> -> vector<16x64xf32>
    %196 = vector.extract_strided_slice %13 {offsets = [64, 0], sizes = [64, 64], strides = [1, 1]} : vector<128x64xbf16> to vector<64x64xbf16>
    %197 = arith.truncf %192 : vector<16x64xf32> to vector<16x64xbf16>
    %cst_79 = arith.constant dense<0.000000e+00> : vector<16x64xf32>
    %198 = tpu.matmul %197, %196, %cst_79 {dimension_numbers = #tpu.dot_dimension_numbers<[1], [0], [0], [1], [0, 0, 1, 1], [], []>} : vector<16x64xbf16>, vector<64x64xbf16>, vector<16x64xf32> -> vector<16x64xf32>
    %199 = arith.addf %195, %198 : vector<16x64xf32>
    %200 = vector.shape_cast %199 : vector<16x64xf32> to vector<1x16x64xf32>
    %c0_80 = arith.constant 0 : index
    %c0_81 = arith.constant 0 : index
    %c0_82 = arith.constant 0 : index
    %201 = vector.load %arg10[%c0_80, %c0_81, %c0_82] : memref<1x16x64xf32, #tpu.memory_space<vmem>>, vector<1x16x64xf32>
    tpu.vector_store %arg10[%c0_80, %c0_81, %c0_82], %200 {strides = array<i32>} : memref<1x16x64xf32, #tpu.memory_space<vmem>>, vector<1x16x64xf32>,
    return
  }
  func.func @transform_0(%arg0: i32) -> (i32, i32, i32) {
    %c0_i32 = arith.constant 0 : i32
    %c0_i32_0 = arith.constant 0 : i32
    %c0_i32_1 = arith.constant 0 : i32
    return %arg0, %c0_i32, %c0_i32_0 : i32, i32, i32
  }
  func.func @transform_1(%arg0: i32) -> (i32, i32, i32) {
    %c0_i32 = arith.constant 0 : i32
    %c0_i32_0 = arith.constant 0 : i32
    %c0_i32_1 = arith.constant 0 : i32
    return %arg0, %c0_i32, %c0_i32_0 : i32, i32, i32
  }
  func.func @transform_2(%arg0: i32) -> (i32, i32, i32) {
    %c0_i32 = arith.constant 0 : i32
    %c0_i32_0 = arith.constant 0 : i32
    %c0_i32_1 = arith.constant 0 : i32
    return %arg0, %c0_i32, %c0_i32_0 : i32, i32, i32
  }
  func.func @transform_3(%arg0: i32) -> (i32, i32, i32) {
    %c0_i32 = arith.constant 0 : i32
    %c0_i32_0 = arith.constant 0 : i32
    %c0_i32_1 = arith.constant 0 : i32
    return %arg0, %c0_i32, %c0_i32_0 : i32, i32, i32
  }
  func.func @transform_4(%arg0: i32) -> (i32, i32, i32) {
    %c0_i32 = arith.constant 0 : i32
    %c0_i32_0 = arith.constant 0 : i32
    %c0_i32_1 = arith.constant 0 : i32
    %c0_i32_2 = arith.constant 0 : i32
    return %c0_i32, %c0_i32_0, %c0_i32_1 : i32, i32, i32
  }
  func.func @transform_5(%arg0: i32) -> (i32, i32) {
    %c0_i32 = arith.constant 0 : i32
    %c0_i32_0 = arith.constant 0 : i32
    %c0_i32_1 = arith.constant 0 : i32
    return %c0_i32, %c0_i32_0 : i32, i32
  }
  func.func @transform_6(%arg0: i32) -> (i32, i32) {
    %c0_i32 = arith.constant 0 : i32
    %c0_i32_0 = arith.constant 0 : i32
    %c0_i32_1 = arith.constant 0 : i32
    return %c0_i32, %c0_i32_0 : i32, i32
  }
  func.func @transform_7(%arg0: i32) -> (i32, i32, i32) {
    %c0_i32 = arith.constant 0 : i32
    %c0_i32_0 = arith.constant 0 : i32
    %c0_i32_1 = arith.constant 0 : i32
    %c0_i32_2 = arith.constant 0 : i32
    return %c0_i32, %c0_i32_0, %c0_i32_1 : i32, i32, i32
  }
  func.func @transform_8(%arg0: i32) -> (i32, i32) {
    %c0_i32 = arith.constant 0 : i32
    %c0_i32_0 = arith.constant 0 : i32
    %c0_i32_1 = arith.constant 0 : i32
    return %c0_i32, %c0_i32_0 : i32, i32
  }
  func.func @transform_9(%arg0: i32) -> (i32, i32, i32) {
    %c0_i32 = arith.constant 0 : i32
    %c0_i32_0 = arith.constant 0 : i32
    %c0_i32_1 = arith.constant 0 : i32
    return %arg0, %c0_i32, %c0_i32_0 : i32, i32, i32
  }
}

</mosaic_0001>

<llo_original>
// kernel: lgcn_forward.1
$region0: #{lgcn_forward.1}
  #allocation0 [shape = 'u32[]', space=smem, size = 0x4, offset = 0x4, fixed_abs, tag = 'smem constant byte address 0x4 - core index']
  #allocation1 [shape = 'u32[144,128]{1,0:T(1,128)}', space=vmem, size = 0x12000, scoped, tag = 'internal scratch']
  %s0 = inlined_call_operand.vmem [shape: bf16[2,16,64], index: 0, kind: input, shape index: {}]
  %s1 = inlined_call_operand.vmem [shape: f32[2,1,64], index: 1, kind: input, shape index: {}]
  %s2 = inlined_call_operand.vmem [shape: f32[2,8,64], index: 2, kind: input, shape index: {}]
  %s3 = inlined_call_operand.vmem [shape: f32[2,8,1], index: 3, kind: input, shape index: {}]
  %s4 = inlined_call_operand.vmem [shape: bf16[6,64,64], index: 4, kind: input, shape index: {}]
  %s5 = inlined_call_operand.vmem [shape: bf16[192,192], index: 5, kind: input, shape index: {}]
  %s6 = inlined_call_operand.vmem [shape: bf16[64,128], index: 6, kind: input, shape index: {}]
  %s7 = inlined_call_operand.vmem [shape: bf16[2,128,64], index: 7, kind: input, shape index: {}]
  %s8 = inlined_call_operand.vmem [shape: f32[3,64], index: 8, kind: input, shape index: {}]
  %s9 = inlined_call_operand.hbm [shape: f32[2,16,64], index: 9, kind: output, shape index: {}]
  %s10 = sld [smem:[#allocation0]]
  $region69: #{lgcn_forward.1} parent=0
    _
  %s12 = ssub.s32 1, %s10
  %s13 = scalar_select 0, %s12, %s10
  $region1: #{lgcn_forward.1} parent=0
    #allocation2 [shape = 'u8[16384]{0}', space=vmem, size = 0x4000, scoped, tag = 'output window, operand 0']
    #allocation3 [shape = 's32[2]{0}', space=sflag, size = 0x8, scoped, tag = 'scoped memory for lgcn_forward.1']
    %14 = vsyncpa [#allocation3], 0
    %s15 = scalar_lea.sflag [#allocation3], 1
    %16 = vsyncpa %s15, 0
    loop: start=0, step=1, limit=4
    $region2: #{lgcn_forward.1} parent=1 // loop_pre_header
      _
    $region3: #{lgcn_forward.1} parent=1 // loop_header
      %s18 = sphi 0, %s22
      %p19 = scmp.ge.s32.totalorder %s18, 4
      %s28 = sphi 0, %s30
      %s31 = sphi 0, %s28
      %s32 = sphi 0, %s31
      %s48 = sphi 0, %s32
      %s54 = sphi 0, %s56
      %s57 = sphi 0, %s54
      %s58 = sphi 0, %s57
      %s74 = sphi 0, %s58
      %s80 = sphi 0, %s82
      %s83 = sphi 0, %s80
      %s84 = sphi 0, %s83
      %s100 = sphi 0, %s84
      %s106 = sphi 0, %s108
      %s109 = sphi 0, %s106
      %s110 = sphi 0, %s109
      %s126 = sphi 0, %s110
      %s130 = sphi 0, %s130
      %s132 = sphi 0, %s130
      %s133 = sphi 0, %s132
      %s147 = sphi 0, %s133
      %s151 = sphi 0, %s151
      %s153 = sphi 0, %s151
      %s154 = sphi 0, %s153
      %s168 = sphi 0, %s154
      %s172 = sphi 0, %s172
      %s174 = sphi 0, %s172
      %s175 = sphi 0, %s174
      %s189 = sphi 0, %s175
      %s193 = sphi 0, %s193
      %s195 = sphi 0, %s193
      %s196 = sphi 0, %s195
      %s210 = sphi 0, %s196
      %s214 = sphi 0, %s214
      %s216 = sphi 0, %s214
      %s217 = sphi 0, %s216
      %s231 = sphi 0, %s217
      %s237 = sphi 0, %s239
      %s240 = sphi 0, %s237
      %s241 = sphi 0, %s240
      %s257 = sphi 0, %s241
    $region4: #{lgcn_forward.1} parent=1 // loop_header_branch
      %21 = sbr.rel (%p19) target = $region8
    $region5: #{lgcn_forward.1} parent=1 // loop_body
      %s23 = ssub.s32 %s18, 1
      %s24 = ssub.s32 %s18, 2
      %s25 = sadd.s32 %s18, 1
      %s26 = ssub.s32 %s18, %s25
      %p27 = scmp.eq.s32.totalorder %s26, 0
      %s29 = sadd.s32 %s28, 1
      %s30 = scalar_select %p27, %s28, %s29
      %p33 = pneg %p27
      %p34 = scmp.eq.s32.totalorder %s18, 1
      %p35 = por %p33, %p34
      %p36 = scmp.ne.s32.totalorder %s28, %s31
      %p37 = scmp.eq.s32.totalorder %s18, 0
      %p38 = por %p36, %p37
      %p39 = scmp.ne.s32.totalorder %s28, %s31
      %p40 = scmp.eq.s32.totalorder %s23, 1
      %p41 = por %p39, %p40
      %p42 = scmp.ne.s32.totalorder %s31, %s32
      %p43 = scmp.eq.s32.totalorder %s23, 0
      %p44 = por %p42, %p43
      %p45 = scmp.ne.s32.totalorder %s31, %s32
      %p46 = scmp.eq.s32.totalorder %s24, 1
      %p47 = por %p45, %p46
      %p49 = scmp.ne.s32.totalorder %s32, %s48
      %p50 = scmp.eq.s32.totalorder %s24, 0
      %p51 = por %p49, %p50
      %s52 = ssub.s32 %s18, %s25
      %p53 = scmp.eq.s32.totalorder %s52, 0
      %s55 = sadd.s32 %s54, 1
      %s56 = scalar_select %p53, %s54, %s55
      %p59 = pneg %p53
      %p60 = scmp.eq.s32.totalorder %s18, 1
      %p61 = por %p59, %p60
      %p62 = scmp.ne.s32.totalorder %s54, %s57
      %p63 = scmp.eq.s32.totalorder %s18, 0
      %p64 = por %p62, %p63
      %p65 = scmp.ne.s32.totalorder %s54, %s57
      %p66 = scmp.eq.s32.totalorder %s23, 1
      %p67 = por %p65, %p66
      %p68 = scmp.ne.s32.totalorder %s57, %s58
      %p69 = scmp.eq.s32.totalorder %s23, 0
      %p70 = por %p68, %p69
      %p71 = scmp.ne.s32.totalorder %s57, %s58
      %p72 = scmp.eq.s32.totalorder %s24, 1
      %p73 = por %p71, %p72
      %p75 = scmp.ne.s32.totalorder %s58, %s74
      %p76 = scmp.eq.s32.totalorder %s24, 0
      %p77 = por %p75, %p76
      %s78 = ssub.s32 %s18, %s25
      %p79 = scmp.eq.s32.totalorder %s78, 0
      %s81 = sadd.s32 %s80, 1
      %s82 = scalar_select %p79, %s80, %s81
      %p85 = pneg %p79
      %p86 = scmp.eq.s32.totalorder %s18, 1
      %p87 = por %p85, %p86
      %p88 = scmp.ne.s32.totalorder %s80, %s83
      %p89 = scmp.eq.s32.totalorder %s18, 0
      %p90 = por %p88, %p89
      %p91 = scmp.ne.s32.totalorder %s80, %s83
      %p92 = scmp.eq.s32.totalorder %s23, 1
      %p93 = por %p91, %p92
      %p94 = scmp.ne.s32.totalorder %s83, %s84
      %p95 = scmp.eq.s32.totalorder %s23, 0
      %p96 = por %p94, %p95
      %p97 = scmp.ne.s32.totalorder %s83, %s84
      %p98 = scmp.eq.s32.totalorder %s24, 1
      %p99 = por %p97, %p98
      %p101 = scmp.ne.s32.totalorder %s84, %s100
      %p102 = scmp.eq.s32.totalorder %s24, 0
      %p103 = por %p101, %p102
      %s104 = ssub.s32 %s18, %s25
      %p105 = scmp.eq.s32.totalorder %s104, 0
      %s107 = sadd.s32 %s106, 1
      %s108 = scalar_select %p105, %s106, %s107
      %p111 = pneg %p105
      %p112 = scmp.eq.s32.totalorder %s18, 1
      %p113 = por %p111, %p112
      %p114 = scmp.ne.s32.totalorder %s106, %s109
      %p115 = scmp.eq.s32.totalorder %s18, 0
      %p116 = por %p114, %p115
      %p117 = scmp.ne.s32.totalorder %s106, %s109
      %p118 = scmp.eq.s32.totalorder %s23, 1
      %p119 = por %p117, %p118
      %p120 = scmp.ne.s32.totalorder %s109, %s110
      %p121 = scmp.eq.s32.totalorder %s23, 0
      %p122 = por %p120, %p121
      %p123 = scmp.ne.s32.totalorder %s109, %s110
      %p124 = scmp.eq.s32.totalorder %s24, 1
      %p125 = por %p123, %p124
      %p127 = scmp.ne.s32.totalorder %s110, %s126
      %p128 = scmp.eq.s32.totalorder %s24, 0
      %p129 = por %p127, %p128
      %s131 = sadd.s32 %s130, 1
      %p134 = scmp.eq.s32.totalorder %s18, 1
      %p135 = scmp.ne.s32.totalorder %s130, %s132
      %p136 = scmp.eq.s32.totalorder %s18, 0
      %p137 = por %p135, %p136
      %p138 = scmp.ne.s32.totalorder %s130, %s132
      %p139 = scmp.eq.s32.totalorder %s23, 1
      %p140 = por %p138, %p139
      %p141 = scmp.ne.s32.totalorder %s132, %s133
      %p142 = scmp.eq.s32.totalorder %s23, 0
      %p143 = por %p141, %p142
      %p144 = scmp.ne.s32.totalorder %s132, %s133
      %p145 = scmp.eq.s32.totalorder %s24, 1
      %p146 = por %p144, %p145
      %p148 = scmp.ne.s32.totalorder %s133, %s147
      %p149 = scmp.eq.s32.totalorder %s24, 0
      %p150 = por %p148, %p149
      %s152 = sadd.s32 %s151, 1
      %p155 = scmp.eq.s32.totalorder %s18, 1
      %p156 = scmp.ne.s32.totalorder %s151, %s153
      %p157 = scmp.eq.s32.totalorder %s18, 0
      %p158 = por %p156, %p157
      %p159 = scmp.ne.s32.totalorder %s151, %s153
      %p160 = scmp.eq.s32.totalorder %s23, 1
      %p161 = por %p159, %p160
      %p162 = scmp.ne.s32.totalorder %s153, %s154
      %p163 = scmp.eq.s32.totalorder %s23, 0
      %p164 = por %p162, %p163
      %p165 = scmp.ne.s32.totalorder %s153, %s154
      %p166 = scmp.eq.s32.totalorder %s24, 1
      %p167 = por %p165, %p166
      %p169 = scmp.ne.s32.totalorder %s154, %s168
      %p170 = scmp.eq.s32.totalorder %s24, 0
      %p171 = por %p169, %p170
      %s173 = sadd.s32 %s172, 1
      %p176 = scmp.eq.s32.totalorder %s18, 1
      %p177 = scmp.ne.s32.totalorder %s172, %s174
      %p178 = scmp.eq.s32.totalorder %s18, 0
      %p179 = por %p177, %p178
      %p180 = scmp.ne.s32.totalorder %s172, %s174
      %p181 = scmp.eq.s32.totalorder %s23, 1
      %p182 = por %p180, %p181
      %p183 = scmp.ne.s32.totalorder %s174, %s175
      %p184 = scmp.eq.s32.totalorder %s23, 0
      %p185 = por %p183, %p184
      %p186 = scmp.ne.s32.totalorder %s174, %s175
      %p187 = scmp.eq.s32.totalorder %s24, 1
      %p188 = por %p186, %p187
      %p190 = scmp.ne.s32.totalorder %s175, %s189
      %p191 = scmp.eq.s32.totalorder %s24, 0
      %p192 = por %p190, %p191
      %s194 = sadd.s32 %s193, 1
      %p197 = scmp.eq.s32.totalorder %s18, 1
      %p198 = scmp.ne.s32.totalorder %s193, %s195
      %p199 = scmp.eq.s32.totalorder %s18, 0
      %p200 = por %p198, %p199
      %p201 = scmp.ne.s32.totalorder %s193, %s195
      %p202 = scmp.eq.s32.totalorder %s23, 1
      %p203 = por %p201, %p202
      %p204 = scmp.ne.s32.totalorder %s195, %s196
      %p205 = scmp.eq.s32.totalorder %s23, 0
      %p206 = por %p204, %p205
      %p207 = scmp.ne.s32.totalorder %s195, %s196
      %p208 = scmp.eq.s32.totalorder %s24, 1
      %p209 = por %p207, %p208
      %p211 = scmp.ne.s32.totalorder %s196, %s210
      %p212 = scmp.eq.s32.totalorder %s24, 0
      %p213 = por %p211, %p212
      %s215 = sadd.s32 %s214, 1
      %p218 = scmp.eq.s32.totalorder %s18, 1
      %p219 = scmp.ne.s32.totalorder %s214, %s216
      %p220 = scmp.eq.s32.totalorder %s18, 0
      %p221 = por %p219, %p220
      %p222 = scmp.ne.s32.totalorder %s214, %s216
      %p223 = scmp.eq.s32.totalorder %s23, 1
      %p224 = por %p222, %p223
      %p225 = scmp.ne.s32.totalorder %s216, %s217
      %p226 = scmp.eq.s32.totalorder %s23, 0
      %p227 = por %p225, %p226
      %p228 = scmp.ne.s32.totalorder %s216, %s217
      %p229 = scmp.eq.s32.totalorder %s24, 1
      %p230 = por %p228, %p229
      %p232 = scmp.ne.s32.totalorder %s217, %s231
      %p233 = scmp.eq.s32.totalorder %s24, 0
      %p234 = por %p232, %p233
      %s235 = ssub.s32 %s18, %s25
      %p236 = scmp.eq.s32.totalorder %s235, 0
      %s238 = sadd.s32 %s237, 1
      %s239 = scalar_select %p236, %s237, %s238
      %p242 = pneg %p236
      %p243 = scmp.eq.s32.totalorder %s18, 1
      %p244 = por %p242, %p243
      %p245 = scmp.ne.s32.totalorder %s237, %s240
      %p246 = scmp.eq.s32.totalorder %s18, 0
      %p247 = por %p245, %p246
      %p248 = scmp.ne.s32.totalorder %s237, %s240
      %p249 = scmp.eq.s32.totalorder %s23, 1
      %p250 = por %p248, %p249
      %p251 = scmp.ne.s32.totalorder %s240, %s241
      %p252 = scmp.eq.s32.totalorder %s23, 0
      %p253 = por %p251, %p252
      %p254 = scmp.ne.s32.totalorder %s240, %s241
      %p255 = scmp.eq.s32.totalorder %s24, 1
      %p256 = por %p254, %p255
      %p258 = scmp.ne.s32.totalorder %s241, %s257
      %p259 = scmp.eq.s32.totalorder %s24, 0
      %p260 = por %p258, %p259
      %p261 = scmp.le.s32.totalorder 1, %s18
      %p262 = scmp.lt.s32.totalorder %s18, 3
      %p263 = pnand %p261, %p262
      %p264 = pneg %p263
      // Predicated region
      $region9: #{lgcn_forward.1} parent=5 // pred_check
        _
      $region10: #{lgcn_forward.1} parent=5 // pred_check_branch
        %266 = sbr.rel (%p263) target = $region12
      $region11: #{lgcn_forward.1} parent=5 // pred_region
        %s267 = ssub.s32 %s18, 1
        // Predicated region
        $region13: #{lgcn_forward.1} parent=11 // pred_check
          %p268 = pneg %p143
        $region14: #{lgcn_forward.1} parent=11 // pred_check_branch
          %270 = sbr.rel (%p268) target = $region16
        $region15: #{lgcn_forward.1} parent=11 // pred_region
          _
        $region16: #{lgcn_forward.1} parent=11 // pred_fallthru
          _
        // Predicated region
        $region17: #{lgcn_forward.1} parent=11 // pred_check
          %p271 = pneg %p164
        $region18: #{lgcn_forward.1} parent=11 // pred_check_branch
          %273 = sbr.rel (%p271) target = $region20
        $region19: #{lgcn_forward.1} parent=11 // pred_region
          _
        $region20: #{lgcn_forward.1} parent=11 // pred_fallthru
          _
        // Predicated region
        $region21: #{lgcn_forward.1} parent=11 // pred_check
          %p274 = pneg %p185
        $region22: #{lgcn_forward.1} parent=11 // pred_check_branch
          %276 = sbr.rel (%p274) target = $region24
        $region23: #{lgcn_forward.1} parent=11 // pred_region
          _
        $region24: #{lgcn_forward.1} parent=11 // pred_fallthru
          _
        // Predicated region
        $region25: #{lgcn_forward.1} parent=11 // pred_check
          %p277 = pneg %p206
        $region26: #{lgcn_forward.1} parent=11 // pred_check_branch
          %279 = sbr.rel (%p277) target = $region28
        $region27: #{lgcn_forward.1} parent=11 // pred_region
          _
        $region28: #{lgcn_forward.1} parent=11 // pred_fallthru
          _
        // Predicated region
        $region29: #{lgcn_forward.1} parent=11 // pred_check
          %p280 = pneg %p227
        $region30: #{lgcn_forward.1} parent=11 // pred_check_branch
          %282 = sbr.rel (%p280) target = $region32
        $region31: #{lgcn_forward.1} parent=11 // pred_region
          _
        $region32: #{lgcn_forward.1} parent=11 // pred_fallthru
          _
      $region12: #{lgcn_forward.1} parent=5 // pred_fallthru
        _
      %p283 = scmp.lt.s32.totalorder %s18, 2
      // Predicated region
      $region33: #{lgcn_forward.1} parent=5 // pred_check
        %p284 = pneg %p283
      $region34: #{lgcn_forward.1} parent=5 // pred_check_branch
        %286 = sbr.rel (%p284) target = $region36
      $region35: #{lgcn_forward.1} parent=5 // pred_region
        // Predicated region
        $region37: #{lgcn_forward.1} parent=35 // pred_check
          %p287 = pneg %p38
        $region38: #{lgcn_forward.1} parent=35 // pred_check_branch
          %289 = sbr.rel (%p287) target = $region40
        $region39: #{lgcn_forward.1} parent=35 // pred_region
          %p290 = scmp.lt.s32.totalorder %s18, 1
          %s291 = scalar_select %p290, %s18, 1
          %s292 = smul.addr %s291, 2
          %s293 = smul.addr %s292, 4
          %s294 = scalar_lea.vmem %s0, %s293
        $region40: #{lgcn_forward.1} parent=35 // pred_fallthru
          _
        // Predicated region
        $region41: #{lgcn_forward.1} parent=35 // pred_check
          %p295 = pneg %p64
        $region42: #{lgcn_forward.1} parent=35 // pred_check_branch
          %297 = sbr.rel (%p295) target = $region44
        $region43: #{lgcn_forward.1} parent=35 // pred_region
          %p298 = scmp.lt.s32.totalorder %s18, 1
          %s299 = scalar_select %p298, %s18, 1
          %s300 = scalar_lea.vmem %s1, %s299
        $region44: #{lgcn_forward.1} parent=35 // pred_fallthru
          _
        // Predicated region
        $region45: #{lgcn_forward.1} parent=35 // pred_check
          %p301 = pneg %p90
        $region46: #{lgcn_forward.1} parent=35 // pred_check_branch
          %303 = sbr.rel (%p301) target = $region48
        $region47: #{lgcn_forward.1} parent=35 // pred_region
          %p304 = scmp.lt.s32.totalorder %s18, 1
          %s305 = scalar_select %p304, %s18, 1
          %s306 = smul.addr %s305, 8
          %s307 = scalar_lea.vmem %s2, %s306
        $region48: #{lgcn_forward.1} parent=35 // pred_fallthru
          _
        // Predicated region
        $region49: #{lgcn_forward.1} parent=35 // pred_check
          %p308 = pneg %p116
        $region50: #{lgcn_forward.1} parent=35 // pred_check_branch
          %310 = sbr.rel (%p308) target = $region52
        $region51: #{lgcn_forward.1} parent=35 // pred_region
          %p311 = scmp.lt.s32.totalorder %s18, 1
          %s312 = scalar_select %p311, %s18, 1
          %s313 = smul.addr %s312, 8
          %s314 = scalar_lea.vmem %s3, %s313
        $region52: #{lgcn_forward.1} parent=35 // pred_fallthru
          _
      $region36: #{lgcn_forward.1} parent=5 // pred_fallthru
        _
      %p315 = scmp.le.s32.totalorder 1, %s18
      %p316 = scmp.lt.s32.totalorder %s18, 3
      %p317 = pnand %p315, %p316
      %p318 = pneg %p317
      // Predicated region
      $region53: #{lgcn_forward.1} parent=5 // pred_check
        _
      $region54: #{lgcn_forward.1} parent=5 // pred_check_branch
        %320 = sbr.rel (%p317) target = $region56
      $region55: #{lgcn_forward.1} parent=5 // pred_region
        %s321 = ssub.s32 %s18, 1
        %p322 = scmp.lt.s32.totalorder %s23, 1
        %s323 = scalar_select %p322, %s23, 1
        %s324 = smul.addr %s323, 2
        %s325 = smul.addr %s324, 4
        %s326 = scalar_lea.vmem %s0, %s325
        %p327 = pneg %p44
        %p328 = pneg %p41
        %p329 = scmp.lt.s32.totalorder %s23, 1
        %s330 = scalar_select %p329, %s23, 1
        %s331 = scalar_lea.vmem %s1, %s330
        %p332 = pneg %p70
        %p333 = pneg %p67
        %p334 = scmp.lt.s32.totalorder %s23, 1
        %s335 = scalar_select %p334, %s23, 1
        %s336 = smul.addr %s335, 8
        %s337 = scalar_lea.vmem %s2, %s336
        %p338 = pneg %p96
        %p339 = pneg %p93
        %p340 = scmp.lt.s32.totalorder %s23, 1
        %s341 = scalar_select %p340, %s23, 1
        %s342 = smul.addr %s341, 8
        %s343 = scalar_lea.vmem %s3, %s342
        %p344 = pneg %p122
        %p345 = pneg %p119
        %p346 = pneg %p143
        %p347 = pneg %p140
        %p348 = pneg %p164
        %p349 = pneg %p161
        %p350 = pneg %p185
        %p351 = pneg %p182
        %p352 = pneg %p206
        %p353 = pneg %p203
        %p354 = pneg %p227
        %p355 = pneg %p224
        %p356 = pneg %p253
        %p357 = pneg %p250
        %s358 = sand.u32 %s240, 1
        %s359 = scalar_lea.sflag [#allocation3], %s358
        %s360 = sand.u32 %s240, 1
        %s361 = smul.addr %s360, 16
        %s362 = scalar_lea.vmem [#allocation2], %s361
        %p363 = scmp.lt.s32.totalorder %s23, 1
        %s364 = scalar_select %p363, %s23, 1
        %s365 = smul.addr %s364, 2
        %s366 = smul.addr %s365, 4
        %s367 = scalar_lea.vmem %s0, %s366
        %p368 = scmp.lt.s32.totalorder %s23, 1
        %s369 = scalar_select %p368, %s23, 1
        %s370 = scalar_lea.vmem %s1, %s369
        %p371 = scmp.lt.s32.totalorder %s23, 1
        %s372 = scalar_select %p371, %s23, 1
        %s373 = smul.addr %s372, 8
        %s374 = scalar_lea.vmem %s2, %s373
        %p375 = scmp.lt.s32.totalorder %s23, 1
        %s376 = scalar_select %p375, %s23, 1
        %s377 = smul.addr %s376, 8
        %s378 = scalar_lea.vmem %s3, %s377
        %v380 = vld [vmem:[%s4] sm:$0xf]
        %v381 = vld [vmem:[%s4 + $0x4] sm:$0xf]
        %v382 = vld [vmem:[%s4 + $0x8] sm:$0xf]
        %v383 = vld [vmem:[%s4 + $0xc] sm:$0xf]
        %v384 = vld [vmem:[%s4 + $0x10] sm:$0xf]
        %v385 = vld [vmem:[%s4 + $0x14] sm:$0xf]
        %v386 = vld [vmem:[%s4 + $0x18] sm:$0xf]
        %v387 = vld [vmem:[%s4 + $0x1c] sm:$0xf]
        %s388 = scalar_lea.vmem %s4, 32
        %v389 = vld [vmem:[%s388] sm:$0xf]
        %v390 = vld [vmem:[%s388 + $0x4] sm:$0xf]
        %v391 = vld [vmem:[%s388 + $0x8] sm:$0xf]
        %v392 = vld [vmem:[%s388 + $0xc] sm:$0xf]
        %v393 = vld [vmem:[%s388 + $0x10] sm:$0xf]
        %v394 = vld [vmem:[%s388 + $0x14] sm:$0xf]
        %v395 = vld [vmem:[%s388 + $0x18] sm:$0xf]
        %v396 = vld [vmem:[%s388 + $0x1c] sm:$0xf]
        %s397 = scalar_lea.vmem %s4, 128
        %v398 = vld [vmem:[%s397] sm:$0xf]
        %v399 = vld [vmem:[%s397 + $0x4] sm:$0xf]
        %v400 = vld [vmem:[%s397 + $0x8] sm:$0xf]
        %v401 = vld [vmem:[%s397 + $0xc] sm:$0xf]
        %v402 = vld [vmem:[%s397 + $0x10] sm:$0xf]
        %v403 = vld [vmem:[%s397 + $0x14] sm:$0xf]
        %v404 = vld [vmem:[%s397 + $0x18] sm:$0xf]
        %v405 = vld [vmem:[%s397 + $0x1c] sm:$0xf]
        %s406 = scalar_lea.vmem %s4, 160
        %v407 = vld [vmem:[%s406] sm:$0xf]
        %v408 = vld [vmem:[%s406 + $0x4] sm:$0xf]
        %v409 = vld [vmem:[%s406 + $0x8] sm:$0xf]
        %v410 = vld [vmem:[%s406 + $0xc] sm:$0xf]
        %v411 = vld [vmem:[%s406 + $0x10] sm:$0xf]
        %v412 = vld [vmem:[%s406 + $0x14] sm:$0xf]
        %v413 = vld [vmem:[%s406 + $0x18] sm:$0xf]
        %v414 = vld [vmem:[%s406 + $0x1c] sm:$0xf]
        %v415 = vld [vmem:[%s5] sm:$0xff]
        %v416 = vld [vmem:[%s5 + $0x8] sm:$0xff]
        %v417 = vld [vmem:[%s5 + $0x10] sm:$0xff]
        %v418 = vld [vmem:[%s5 + $0x18] sm:$0xff]
        %v419 = vld [vmem:[%s5 + $0x20] sm:$0xff]
        %v420 = vld [vmem:[%s5 + $0x28] sm:$0xff]
        %v421 = vld [vmem:[%s5 + $0x30] sm:$0xff]
        %v422 = vld [vmem:[%s5 + $0x38] sm:$0xff]
        %v423 = vld [vmem:[%s5 + $0x40] sm:$0xff]
        %v424 = vld [vmem:[%s5 + $0x48] sm:$0xff]
        %v425 = vld [vmem:[%s5 + $0x50] sm:$0xff]
        %v426 = vld [vmem:[%s5 + $0x58] sm:$0xff]
        %v427 = vld [vmem:[%s5 + $0x60] sm:$0xff]
        %v428 = vld [vmem:[%s5 + $0x68] sm:$0xff]
        %v429 = vld [vmem:[%s5 + $0x70] sm:$0xff]
        %v430 = vld [vmem:[%s5 + $0x78] sm:$0xff]
        %v431 = vld [vmem:[%s5 + $0x80] sm:$0xff]
        %v432 = vld [vmem:[%s5 + $0x88] sm:$0xff]
        %v433 = vld [vmem:[%s5 + $0x90] sm:$0xff]
        %v434 = vld [vmem:[%s5 + $0x98] sm:$0xff]
        %v435 = vld [vmem:[%s5 + $0xa0] sm:$0xff]
        %v436 = vld [vmem:[%s5 + $0xa8] sm:$0xff]
        %v437 = vld [vmem:[%s5 + $0xb0] sm:$0xff]
        %v438 = vld [vmem:[%s5 + $0xb8] sm:$0xff]
        %v439 = vld [vmem:[%s6] sm:$0xf]
        %v440 = vld [vmem:[%s6 + $0x4] sm:$0xf]
        %v441 = vld [vmem:[%s6 + $0x8] sm:$0xf]
        %v442 = vld [vmem:[%s6 + $0xc] sm:$0xf]
        %v443 = vld [vmem:[%s6 + $0x10] sm:$0xf]
        %v444 = vld [vmem:[%s6 + $0x14] sm:$0xf]
        %v445 = vld [vmem:[%s6 + $0x18] sm:$0xf]
        %v446 = vld [vmem:[%s6 + $0x1c] sm:$0xf]
        %v447 = vld [vmem:[%s7] sm:$0xf]
        %v448 = vld [vmem:[%s7 + $0x4] sm:$0xf]
        %v449 = vld [vmem:[%s7 + $0x8] sm:$0xf]
        %v450 = vld [vmem:[%s7 + $0xc] sm:$0xf]
        %v451 = vld [vmem:[%s7 + $0x10] sm:$0xf]
        %v452 = vld [vmem:[%s7 + $0x14] sm:$0xf]
        %v453 = vld [vmem:[%s7 + $0x18] sm:$0xf]
        %v454 = vld [vmem:[%s7 + $0x1c] sm:$0xf]
        %v455 = vld [vmem:[%s7 + $0x20] sm:$0xf]
        %v456 = vld [vmem:[%s7 + $0x24] sm:$0xf]
        %v457 = vld [vmem:[%s7 + $0x28] sm:$0xf]
        %v458 = vld [vmem:[%s7 + $0x2c] sm:$0xf]
        %v459 = vld [vmem:[%s7 + $0x30] sm:$0xf]
        %v460 = vld [vmem:[%s7 + $0x34] sm:$0xf]
        %v461 = vld [vmem:[%s7 + $0x38] sm:$0xf]
        %v462 = vld [vmem:[%s7 + $0x3c] sm:$0xf]
        %s463 = scalar_lea.vmem %s7, 64
        %v464 = vld [vmem:[%s463] sm:$0xf]
        %v465 = vld [vmem:[%s463 + $0x4] sm:$0xf]
        %v466 = vld [vmem:[%s463 + $0x8] sm:$0xf]
        %v467 = vld [vmem:[%s463 + $0xc] sm:$0xf]
        %v468 = vld [vmem:[%s463 + $0x10] sm:$0xf]
        %v469 = vld [vmem:[%s463 + $0x14] sm:$0xf]
        %v470 = vld [vmem:[%s463 + $0x18] sm:$0xf]
        %v471 = vld [vmem:[%s463 + $0x1c] sm:$0xf]
        %v472 = vld [vmem:[%s463 + $0x20] sm:$0xf]
        %v473 = vld [vmem:[%s463 + $0x24] sm:$0xf]
        %v474 = vld [vmem:[%s463 + $0x28] sm:$0xf]
        %v475 = vld [vmem:[%s463 + $0x2c] sm:$0xf]
        %v476 = vld [vmem:[%s463 + $0x30] sm:$0xf]
        %v477 = vld [vmem:[%s463 + $0x34] sm:$0xf]
        %v478 = vld [vmem:[%s463 + $0x38] sm:$0xf]
        %v479 = vld [vmem:[%s463 + $0x3c] sm:$0xf]
        %v480 = vld [vmem:[%s8] sm:$0x1]
        %v481 = vld [vmem:[%s8 + $0x1] sm:$0x1]
        %v482 = vld [vmem:[%s8 + $0x2] sm:$0x1]
        %v483 = vld [vmem:[%s367] sm:$0xf]
        %v484 = vld [vmem:[%s367 + $0x4] sm:$0xf]
        %v487 = vunpack.c.l.b16 %v483
        %v488 = vunpack.c.l.b16 %v484
        %v489 = vpack.c.b16 %v488, %v487
        %v498 = vunpack.c.l.b16 %v380
        %v499 = vunpack.c.l.b16 %v381
        %v500 = vunpack.c.l.b16 %v382
        %v501 = vunpack.c.l.b16 %v383
        %v502 = vunpack.c.l.b16 %v384
        %v503 = vunpack.c.l.b16 %v385
        %v504 = vunpack.c.l.b16 %v386
        %v505 = vunpack.c.l.b16 %v387
        %v506 = vpack.c.b16 %v499, %v498
        %v507 = vpack.c.b16 %v501, %v500
        %v508 = vpack.c.b16 %v503, %v502
        %v509 = vpack.c.b16 %v505, %v504
        %vm514 = vcmask 523264
        %v516 = vsel %vm514, %v489, 0
        %518 = vmatprep.subr.bf16.mxu0 0
        %519 = vmatpush1.bf16.msra.mxu0 %v506
        %520 = vmatprep.subr.bf16.mxu0 0
        %521 = vmatpush1.bf16.msra.mxu0 %v507
        %522 = vmatprep.subr.bf16.mxu0 0
        %523 = vmatpush1.bf16.msra.mxu0 %v508
        %524 = vmatprep.subr.bf16.mxu0 0
        %525 = vmatpush1.bf16.msra.mxu0 %v509
        %526 = vmatprep.subr.bf16.mxu0 0
        %527 = vmatpush1.bf16.msra.mxu0 0
        %528 = vmatprep.subr.bf16.mxu0 0
        %529 = vmatpush1.bf16.msra.mxu0 0
        %530 = vmatprep.subr.bf16.mxu0 0
        %531 = vmatpush1.bf16.msra.mxu0 0
        %532 = vmatprep.subr.bf16.mxu0 0
        %533 = vmatpush1.bf16.msra.mxu0 0
        %534 = vmatprep.subr.bf16.mxu0 0
        %535 = vmatpush1.bf16.msra.mxu0 0
        %536 = vmatprep.subr.bf16.mxu0 0
        %537 = vmatpush1.bf16.msra.mxu0 0
        %538 = vmatprep.subr.bf16.mxu0 0
        %539 = vmatpush1.bf16.msra.mxu0 0
        %540 = vmatprep.subr.bf16.mxu0 0
        %541 = vmatpush1.bf16.msra.mxu0 0
        %542 = vmatprep.subr.bf16.mxu0 0
        %543 = vmatpush1.bf16.msra.mxu0 0
        %544 = vmatprep.subr.bf16.mxu0 0
        %545 = vmatpush1.bf16.msra.mxu0 0
        %546 = vmatprep.subr.bf16.mxu0 0
        %547 = vmatpush1.bf16.msra.mxu0 0
        %548 = vmatprep.subr.bf16.mxu0 0
        %549 = vmatpush1.bf16.msra.mxu0 0
        %550 = vmatprep.mubr.bf16.mxu0 0
        %551 = vmatmul.mubr.bf16.gmra.mrb[0].mxu0 %v516
        %v552 = vpop.f32.mrb[0].mxu0
        %v553 = vadd.f32 0.0, %v552
        %v554 = vpop.f32.mrb[0].mxu0
        %v555 = vpop.f32.mrb[0].mxu0
        %v556 = vadd.f32 0.0, %v555
        %v557 = vpop.f32.mrb[0].mxu0
        %558 = vdwg.mxu0
        %v559 = vlaneseq
        %v560 = vshrl.u32 %v559, 7
        %v561 = vsub.s32 0, %v560
        %v562 = vrot.slane %v482, %v561
        %v563 = vld [vmem:[%s370] sm:$0x1]
        %v564 = vld [vmem:[%s374] sm:$0xff]
        %v565 = vld [vmem:[%s378] sm:$0xff]
        %v566 = vsub.f32 %v565, 1.0
        %v567 = vmul.f32 %v566, 1e+30
        %v568 = vpack.c.bf16 %v563, %v563
        %v577 = vunpack.c.l.b16 %v389
        %v578 = vunpack.c.l.b16 %v390
        %v579 = vunpack.c.l.b16 %v391
        %v580 = vunpack.c.l.b16 %v392
        %v581 = vunpack.c.l.b16 %v393
        %v582 = vunpack.c.l.b16 %v394
        %v583 = vunpack.c.l.b16 %v395
        %v584 = vunpack.c.l.b16 %v396
        %v585 = vpack.c.b16 %v578, %v577
        %v586 = vpack.c.b16 %v580, %v579
        %v587 = vpack.c.b16 %v582, %v581
        %v588 = vpack.c.b16 %v584, %v583
        %v594 = vsel %vm514, %v568, 0
        %596 = vmatprep.subr.bf16.mxu0 0
        %597 = vmatpush1.bf16.msra.mxu0 %v585
        %598 = vmatprep.subr.bf16.mxu0 0
        %599 = vmatpush1.bf16.msra.mxu0 %v586
        %600 = vmatprep.subr.bf16.mxu0 0
        %601 = vmatpush1.bf16.msra.mxu0 %v587
        %602 = vmatprep.subr.bf16.mxu0 0
        %603 = vmatpush1.bf16.msra.mxu0 %v588
        %604 = vmatprep.subr.bf16.mxu0 0
        %605 = vmatpush1.bf16.msra.mxu0 0
        %606 = vmatprep.subr.bf16.mxu0 0
        %607 = vmatpush1.bf16.msra.mxu0 0
        %608 = vmatprep.subr.bf16.mxu0 0
        %609 = vmatpush1.bf16.msra.mxu0 0
        %610 = vmatprep.subr.bf16.mxu0 0
        %611 = vmatpush1.bf16.msra.mxu0 0
        %612 = vmatprep.subr.bf16.mxu0 0
        %613 = vmatpush1.bf16.msra.mxu0 0
        %614 = vmatprep.subr.bf16.mxu0 0
        %615 = vmatpush1.bf16.msra.mxu0 0
        %616 = vmatprep.subr.bf16.mxu0 0
        %617 = vmatpush1.bf16.msra.mxu0 0
        %618 = vmatprep.subr.bf16.mxu0 0
        %619 = vmatpush1.bf16.msra.mxu0 0
        %620 = vmatprep.subr.bf16.mxu0 0
        %621 = vmatpush1.bf16.msra.mxu0 0
        %622 = vmatprep.subr.bf16.mxu0 0
        %623 = vmatpush1.bf16.msra.mxu0 0
        %624 = vmatprep.subr.bf16.mxu0 0
        %625 = vmatpush1.bf16.msra.mxu0 0
        %626 = vmatprep.subr.bf16.mxu0 0
        %627 = vmatpush1.bf16.msra.mxu0 0
        %628 = vmatprep.mubr.bf16.mxu0 0
        %629 = vmatmul.mubr.bf16.gmra.mrb[0].mxu0 %v594
        %v630 = vpop.f32.mrb[0].mxu0
        %v631 = vadd.f32 %v481, %v630
        %v632 = vpop.f32.mrb[0].mxu0
        %v633 = vpop.f32.mrb[0].mxu0
        %v634 = vpop.f32.mrb[0].mxu0
        %635 = vdwg.mxu0
        %v636 = vmax.f32 %v631, 0.0
        %s637 = scalar_lea.vmem %s4, 64
        %v638 = vld [vmem:[%s637] sm:$0xf]
        %v639 = vld [vmem:[%s637 + $0x4] sm:$0xf]
        %v640 = vld [vmem:[%s637 + $0x8] sm:$0xf]
        %v641 = vld [vmem:[%s637 + $0xc] sm:$0xf]
        %v642 = vld [vmem:[%s637 + $0x10] sm:$0xf]
        %v643 = vld [vmem:[%s637 + $0x14] sm:$0xf]
        %v644 = vld [vmem:[%s637 + $0x18] sm:$0xf]
        %v645 = vld [vmem:[%s637 + $0x1c] sm:$0xf]
        %v646 = vpack.c.bf16 %v636, %v636
        %v655 = vunpack.c.l.b16 %v638
        %v656 = vunpack.c.l.b16 %v639
        %v657 = vunpack.c.l.b16 %v640
        %v658 = vunpack.c.l.b16 %v641
        %v659 = vunpack.c.l.b16 %v642
        %v660 = vunpack.c.l.b16 %v643
        %v661 = vunpack.c.l.b16 %v644
        %v662 = vunpack.c.l.b16 %v645
        %v663 = vpack.c.b16 %v656, %v655
        %v664 = vpack.c.b16 %v658, %v657
        %v665 = vpack.c.b16 %v660, %v659
        %v666 = vpack.c.b16 %v662, %v661
        %v672 = vsel %vm514, %v646, 0
        %674 = vmatprep.subr.bf16.mxu0 0
        %675 = vmatpush1.bf16.msra.mxu0 %v663
        %676 = vmatprep.subr.bf16.mxu0 0
        %677 = vmatpush1.bf16.msra.mxu0 %v664
        %678 = vmatprep.subr.bf16.mxu0 0
        %679 = vmatpush1.bf16.msra.mxu0 %v665
        %680 = vmatprep.subr.bf16.mxu0 0
        %681 = vmatpush1.bf16.msra.mxu0 %v666
        %682 = vmatprep.subr.bf16.mxu0 0
        %683 = vmatpush1.bf16.msra.mxu0 0
        %684 = vmatprep.subr.bf16.mxu0 0
        %685 = vmatpush1.bf16.msra.mxu0 0
        %686 = vmatprep.subr.bf16.mxu0 0
        %687 = vmatpush1.bf16.msra.mxu0 0
        %688 = vmatprep.subr.bf16.mxu0 0
        %689 = vmatpush1.bf16.msra.mxu0 0
        %690 = vmatprep.subr.bf16.mxu0 0
        %691 = vmatpush1.bf16.msra.mxu0 0
        %692 = vmatprep.subr.bf16.mxu0 0
        %693 = vmatpush1.bf16.msra.mxu0 0
        %694 = vmatprep.subr.bf16.mxu0 0
        %695 = vmatpush1.bf16.msra.mxu0 0
        %696 = vmatprep.subr.bf16.mxu0 0
        %697 = vmatpush1.bf16.msra.mxu0 0
        %698 = vmatprep.subr.bf16.mxu0 0
        %699 = vmatpush1.bf16.msra.mxu0 0
        %700 = vmatprep.subr.bf16.mxu0 0
        %701 = vmatpush1.bf16.msra.mxu0 0
        %702 = vmatprep.subr.bf16.mxu0 0
        %703 = vmatpush1.bf16.msra.mxu0 0
        %704 = vmatprep.subr.bf16.mxu0 0
        %705 = vmatpush1.bf16.msra.mxu0 0
        %706 = vmatprep.mubr.bf16.mxu0 0
        %707 = vmatmul.mubr.bf16.gmra.mrb[0].mxu0 %v672
        %v708 = vpop.f32.mrb[0].mxu0
        %v709 = vadd.f32 0.0, %v708
        %v710 = vpop.f32.mrb[0].mxu0
        %v711 = vpop.f32.mrb[0].mxu0
        %v712 = vpop.f32.mrb[0].mxu0
        %713 = vdwg.mxu0
        %v714 = vlaneseq
        %v715 = vshrl.u32 %v714, 7
        %v716 = vsub.s32 0, %v715
        %v717 = vrot.slane %v709, %v716
        %v718 = vmul.f32 %v564, %v717
        %v719 = vlaneseq
        %v720 = vshrl.u32 %v719, 7
        %v721 = vsub.s32 0, %v720
        %v722 = vrot.slane %v480, %v721
        %v723 = vmul.f32 %v718, %v722
        %v724 = vsel %vm514, %v723, 0.0
        %725 = vadd.xlane.f32.xlu0 %v724
        %v726 = vpop.xlane.xlu0 %725
        %v727 = vadd.f32 %v726, %v567
        %vm728 = vcmask 7168
        %v729 = vsel %vm728, %v727, -inf
        %v730 = vrot.slane %v729, 4
        %v731 = vmax.f32 %v729, %v730
        %v732 = vrot.slane %v731, 2
        %v733 = vmax.f32 %v731, %v732
        %v734 = vrot.slane %v733, 1
        %v735 = vmax.f32 %v733, %v734
        %v736 = vsub.f32 %v727, %v735
        %v737 = vmul.f32 %v736, 1.442695
        %v738 = vpow.pop %v737
        %v739 = vsel %vm728, %v738, 0.0
        %v740 = vrot.slane %v739, 4
        %v741 = vadd.f32 %v739, %v740
        %v742 = vrot.slane %v741, 2
        %v743 = vadd.f32 %v741, %v742
        %v744 = vrot.slane %v743, 1
        %v745 = vadd.f32 %v743, %v744
        %v746 = vrcp.pop %v745
        %v747 = vmul.f32 %v738, %v746
        %749 = vset.pattern.permute.xlu0 0
        %750 = vperm.xlu0 %749, %v747
        %v751 = vpop.permute.xlu0 %750
        %v753 = vmul.f32 %v751, %v564
        %v754 = vsel %vm514, %v753, 0.0
        %v755 = vrot.slane %v754, 4
        %v756 = vadd.f32 %v754, %v755
        %v757 = vrot.slane %v756, 2
        %v758 = vadd.f32 %v756, %v757
        %v759 = vrot.slane %v758, 1
        %v760 = vadd.f32 %v758, %v759
        %v761 = vpack.c.bf16 %v556, %v553
        %v770 = vunpack.c.l.b16 %v398
        %v771 = vunpack.c.l.b16 %v399
        %v772 = vunpack.c.l.b16 %v400
        %v773 = vunpack.c.l.b16 %v401
        %v774 = vunpack.c.l.b16 %v402
        %v775 = vunpack.c.l.b16 %v403
        %v776 = vunpack.c.l.b16 %v404
        %v777 = vunpack.c.l.b16 %v405
        %v778 = vpack.c.b16 %v771, %v770
        %v779 = vpack.c.b16 %v773, %v772
        %v780 = vpack.c.b16 %v775, %v774
        %v781 = vpack.c.b16 %v777, %v776
        %v787 = vsel %vm514, %v761, 0
        %789 = vmatprep.subr.bf16.mxu0 0
        %790 = vmatpush1.bf16.msra.mxu0 %v778
        %791 = vmatprep.subr.bf16.mxu0 0
        %792 = vmatpush1.bf16.msra.mxu0 %v779
        %793 = vmatprep.subr.bf16.mxu0 0
        %794 = vmatpush1.bf16.msra.mxu0 %v780
        %795 = vmatprep.subr.bf16.mxu0 0
        %796 = vmatpush1.bf16.msra.mxu0 %v781
        %797 = vmatprep.subr.bf16.mxu0 0
        %798 = vmatpush1.bf16.msra.mxu0 0
        %799 = vmatprep.subr.bf16.mxu0 0
        %800 = vmatpush1.bf16.msra.mxu0 0
        %801 = vmatprep.subr.bf16.mxu0 0
        %802 = vmatpush1.bf16.msra.mxu0 0
        %803 = vmatprep.subr.bf16.mxu0 0
        %804 = vmatpush1.bf16.msra.mxu0 0
        %805 = vmatprep.subr.bf16.mxu0 0
        %806 = vmatpush1.bf16.msra.mxu0 0
        %807 = vmatprep.subr.bf16.mxu0 0
        %808 = vmatpush1.bf16.msra.mxu0 0
        %809 = vmatprep.subr.bf16.mxu0 0
        %810 = vmatpush1.bf16.msra.mxu0 0
        %811 = vmatprep.subr.bf16.mxu0 0
        %812 = vmatpush1.bf16.msra.mxu0 0
        %813 = vmatprep.subr.bf16.mxu0 0
        %814 = vmatpush1.bf16.msra.mxu0 0
        %815 = vmatprep.subr.bf16.mxu0 0
        %816 = vmatpush1.bf16.msra.mxu0 0
        %817 = vmatprep.subr.bf16.mxu0 0
        %818 = vmatpush1.bf16.msra.mxu0 0
        %819 = vmatprep.subr.bf16.mxu0 0
        %820 = vmatpush1.bf16.msra.mxu0 0
        %821 = vmatprep.mubr.bf16.mxu0 0
        %822 = vmatmul.mubr.bf16.gmra.mrb[0].mxu0 %v787
        %v823 = vpop.f32.mrb[0].mxu0
        %v824 = vadd.f32 0.0, %v823
        %v825 = vpop.f32.mrb[0].mxu0
        %v826 = vpop.f32.mrb[0].mxu0
        %v827 = vadd.f32 0.0, %v826
        %v828 = vpop.f32.mrb[0].mxu0
        %829 = vdwg.mxu0
        %v830 = vpack.c.bf16 %v562, %v562
        %v839 = vunpack.c.l.b16 %v407
        %v840 = vunpack.c.l.b16 %v408
        %v841 = vunpack.c.l.b16 %v409
        %v842 = vunpack.c.l.b16 %v410
        %v843 = vunpack.c.l.b16 %v411
        %v844 = vunpack.c.l.b16 %v412
        %v845 = vunpack.c.l.b16 %v413
        %v846 = vunpack.c.l.b16 %v414
        %v847 = vpack.c.b16 %v840, %v839
        %v848 = vpack.c.b16 %v842, %v841
        %v849 = vpack.c.b16 %v844, %v843
        %v850 = vpack.c.b16 %v846, %v845
        %v856 = vsel %vm514, %v830, 0
        %858 = vmatprep.subr.bf16.mxu0 0
        %859 = vmatpush1.bf16.msra.mxu0 %v847
        %860 = vmatprep.subr.bf16.mxu0 0
        %861 = vmatpush1.bf16.msra.mxu0 %v848
        %862 = vmatprep.subr.bf16.mxu0 0
        %863 = vmatpush1.bf16.msra.mxu0 %v849
        %864 = vmatprep.subr.bf16.mxu0 0
        %865 = vmatpush1.bf16.msra.mxu0 %v850
        %866 = vmatprep.subr.bf16.mxu0 0
        %867 = vmatpush1.bf16.msra.mxu0 0
        %868 = vmatprep.subr.bf16.mxu0 0
        %869 = vmatpush1.bf16.msra.mxu0 0
        %870 = vmatprep.subr.bf16.mxu0 0
        %871 = vmatpush1.bf16.msra.mxu0 0
        %872 = vmatprep.subr.bf16.mxu0 0
        %873 = vmatpush1.bf16.msra.mxu0 0
        %874 = vmatprep.subr.bf16.mxu0 0
        %875 = vmatpush1.bf16.msra.mxu0 0
        %876 = vmatprep.subr.bf16.mxu0 0
        %877 = vmatpush1.bf16.msra.mxu0 0
        %878 = vmatprep.subr.bf16.mxu0 0
        %879 = vmatpush1.bf16.msra.mxu0 0
        %880 = vmatprep.subr.bf16.mxu0 0
        %881 = vmatpush1.bf16.msra.mxu0 0
        %882 = vmatprep.subr.bf16.mxu0 0
        %883 = vmatpush1.bf16.msra.mxu0 0
        %884 = vmatprep.subr.bf16.mxu0 0
        %885 = vmatpush1.bf16.msra.mxu0 0
        %886 = vmatprep.subr.bf16.mxu0 0
        %887 = vmatpush1.bf16.msra.mxu0 0
        %888 = vmatprep.subr.bf16.mxu0 0
        %889 = vmatpush1.bf16.msra.mxu0 0
        %890 = vmatprep.mubr.bf16.mxu0 0
        %891 = vmatmul.mubr.bf16.gmra.mrb[0].mxu0 %v856
        %v892 = vpop.f32.mrb[0].mxu0
        %v893 = vadd.f32 0.0, %v892
        %v894 = vpop.f32.mrb[0].mxu0
        %v895 = vpop.f32.mrb[0].mxu0
        %v896 = vadd.f32 0.0, %v895
        %v897 = vpop.f32.mrb[0].mxu0
        %898 = vdwg.mxu0
        %v899 = vmul.f32 %v824, %v893
        %v900 = vmul.f32 %v827, %v896
        %v909 = vunpack.c.l.b16 %v423
        %v910 = vunpack.c.h.b16 %v423
        %v911 = vunpack.c.l.b16 %v424
        %v912 = vunpack.c.h.b16 %v424
        %v913 = vunpack.c.l.b16 %v425
        %v914 = vunpack.c.h.b16 %v425
        %v915 = vunpack.c.l.b16 %v426
        %v916 = vunpack.c.h.b16 %v426
        %v917 = vunpack.c.l.b16 %v427
        %v918 = vunpack.c.h.b16 %v427
        %v919 = vunpack.c.l.b16 %v428
        %v920 = vunpack.c.h.b16 %v428
        %v921 = vunpack.c.l.b16 %v429
        %v922 = vunpack.c.h.b16 %v429
        %v923 = vunpack.c.l.b16 %v430
        %v924 = vunpack.c.h.b16 %v430
        %v925 = vpack.c.b16 %v911, %v909
        %v926 = vpack.c.b16 %v912, %v910
        %v927 = vpack.c.b16 %v915, %v913
        %v928 = vpack.c.b16 %v916, %v914
        %v929 = vpack.c.b16 %v919, %v917
        %v930 = vpack.c.b16 %v920, %v918
        %v931 = vpack.c.b16 %v923, %v921
        %v932 = vpack.c.b16 %v924, %v922
        %941 = vmatprep.subr.bf16.mxu0 %v926
        %942 = vmatpush1.bf16.msra.mxu0 %v925
        %943 = vmatprep.subr.bf16.mxu0 %v928
        %944 = vmatpush1.bf16.msra.mxu0 %v927
        %945 = vmatprep.subr.bf16.mxu0 %v930
        %946 = vmatpush1.bf16.msra.mxu0 %v929
        %947 = vmatprep.subr.bf16.mxu0 %v932
        %948 = vmatpush1.bf16.msra.mxu0 %v931
        %949 = vmatprep.subr.bf16.mxu0 0
        %950 = vmatpush1.bf16.msra.mxu0 0
        %951 = vmatprep.subr.bf16.mxu0 0
        %952 = vmatpush1.bf16.msra.mxu0 0
        %953 = vmatprep.subr.bf16.mxu0 0
        %954 = vmatpush1.bf16.msra.mxu0 0
        %955 = vmatprep.subr.bf16.mxu0 0
        %956 = vmatpush1.bf16.msra.mxu0 0
        %957 = vmatprep.subr.bf16.mxu0 0
        %958 = vmatpush1.bf16.msra.mxu0 0
        %959 = vmatprep.subr.bf16.mxu0 0
        %960 = vmatpush1.bf16.msra.mxu0 0
        %961 = vmatprep.subr.bf16.mxu0 0
        %962 = vmatpush1.bf16.msra.mxu0 0
        %963 = vmatprep.subr.bf16.mxu0 0
        %964 = vmatpush1.bf16.msra.mxu0 0
        %965 = vmatprep.subr.bf16.mxu0 0
        %966 = vmatpush1.bf16.msra.mxu0 0
        %967 = vmatprep.subr.bf16.mxu0 0
        %968 = vmatpush1.bf16.msra.mxu0 0
        %969 = vmatprep.subr.bf16.mxu0 0
        %970 = vmatpush1.bf16.msra.mxu0 0
        %971 = vmatprep.subr.bf16.mxu0 0
        %972 = vmatpush1.bf16.msra.mxu0 0
        %973 = vmatprep.mubr.bf16.mxu0 0
        %974 = vmatmul.mubr.bf16.gmra.mrb[0].mxu0 %v856
        %v975 = vpop.f32.mrb[0].mxu0
        %v976 = vadd.f32 0.0, %v975
        %v977 = vpop.f32.mrb[0].mxu0
        %v978 = vadd.f32 0.0, %v977
        %v979 = vpop.f32.mrb[0].mxu0
        %v980 = vadd.f32 0.0, %v979
        %v981 = vpop.f32.mrb[0].mxu0
        %v982 = vadd.f32 0.0, %v981
        %983 = vdwg.mxu0
        %v992 = vunpack.c.l.b16 %v415
        %v993 = vunpack.c.h.b16 %v415
        %v994 = vunpack.c.l.b16 %v416
        %v995 = vunpack.c.h.b16 %v416
        %v996 = vunpack.c.l.b16 %v417
        %v997 = vunpack.c.h.b16 %v417
        %v998 = vunpack.c.l.b16 %v418
        %v999 = vunpack.c.h.b16 %v418
        %v1000 = vunpack.c.l.b16 %v419
        %v1001 = vunpack.c.h.b16 %v419
        %v1002 = vunpack.c.l.b16 %v420
        %v1003 = vunpack.c.h.b16 %v420
        %v1004 = vunpack.c.l.b16 %v421
        %v1005 = vunpack.c.h.b16 %v421
        %v1006 = vunpack.c.l.b16 %v422
        %v1007 = vunpack.c.h.b16 %v422
        %v1008 = vpack.c.b16 %v994, %v992
        %v1009 = vpack.c.b16 %v995, %v993
        %v1010 = vpack.c.b16 %v998, %v996
        %v1011 = vpack.c.b16 %v999, %v997
        %v1012 = vpack.c.b16 %v1002, %v1000
        %v1013 = vpack.c.b16 %v1003, %v1001
        %v1014 = vpack.c.b16 %v1006, %v1004
        %v1015 = vpack.c.b16 %v1007, %v1005
        %1024 = vmatprep.subr.bf16.mxu0 %v1009
        %1025 = vmatpush1.bf16.msra.mxu0 %v1008
        %1026 = vmatprep.subr.bf16.mxu0 %v1011
        %1027 = vmatpush1.bf16.msra.mxu0 %v1010
        %1028 = vmatprep.subr.bf16.mxu0 %v1013
        %1029 = vmatpush1.bf16.msra.mxu0 %v1012
        %1030 = vmatprep.subr.bf16.mxu0 %v1015
        %1031 = vmatpush1.bf16.msra.mxu0 %v1014
        %1032 = vmatprep.subr.bf16.mxu0 0
        %1033 = vmatpush1.bf16.msra.mxu0 0
        %1034 = vmatprep.subr.bf16.mxu0 0
        %1035 = vmatpush1.bf16.msra.mxu0 0
        %1036 = vmatprep.subr.bf16.mxu0 0
        %1037 = vmatpush1.bf16.msra.mxu0 0
        %1038 = vmatprep.subr.bf16.mxu0 0
        %1039 = vmatpush1.bf16.msra.mxu0 0
        %1040 = vmatprep.subr.bf16.mxu0 0
        %1041 = vmatpush1.bf16.msra.mxu0 0
        %1042 = vmatprep.subr.bf16.mxu0 0
        %1043 = vmatpush1.bf16.msra.mxu0 0
        %1044 = vmatprep.subr.bf16.mxu0 0
        %1045 = vmatpush1.bf16.msra.mxu0 0
        %1046 = vmatprep.subr.bf16.mxu0 0
        %1047 = vmatpush1.bf16.msra.mxu0 0
        %1048 = vmatprep.subr.bf16.mxu0 0
        %1049 = vmatpush1.bf16.msra.mxu0 0
        %1050 = vmatprep.subr.bf16.mxu0 0
        %1051 = vmatpush1.bf16.msra.mxu0 0
        %1052 = vmatprep.subr.bf16.mxu0 0
        %1053 = vmatpush1.bf16.msra.mxu0 0
        %1054 = vmatprep.subr.bf16.mxu0 0
        %1055 = vmatpush1.bf16.msra.mxu0 0
        %1056 = vmatprep.mubr.bf16.mxu0 0
        %1057 = vmatmul.mubr.bf16.gmra.mrb[0].mxu0 %v787
        %v1058 = vpop.f32.mrb[0].mxu0
        %v1059 = vadd.f32 %v976, %v1058
        %v1060 = vpop.f32.mrb[0].mxu0
        %v1061 = vadd.f32 %v978, %v1060
        %v1062 = vpop.f32.mrb[0].mxu0
        %v1063 = vadd.f32 %v980, %v1062
        %v1064 = vpop.f32.mrb[0].mxu0
        %v1065 = vadd.f32 %v982, %v1064
        %1066 = vdwg.mxu0
        %v1067 = vpack.c.bf16 %v900, %v899
        %v1076 = vunpack.c.l.b16 %v431
        %v1077 = vunpack.c.h.b16 %v431
        %v1078 = vunpack.c.l.b16 %v432
        %v1079 = vunpack.c.h.b16 %v432
        %v1080 = vunpack.c.l.b16 %v433
        %v1081 = vunpack.c.h.b16 %v433
        %v1082 = vunpack.c.l.b16 %v434
        %v1083 = vunpack.c.h.b16 %v434
        %v1084 = vunpack.c.l.b16 %v435
        %v1085 = vunpack.c.h.b16 %v435
        %v1086 = vunpack.c.l.b16 %v436
        %v1087 = vunpack.c.h.b16 %v436
        %v1088 = vunpack.c.l.b16 %v437
        %v1089 = vunpack.c.h.b16 %v437
        %v1090 = vunpack.c.l.b16 %v438
        %v1091 = vunpack.c.h.b16 %v438
        %v1092 = vpack.c.b16 %v1078, %v1076
        %v1093 = vpack.c.b16 %v1079, %v1077
        %v1094 = vpack.c.b16 %v1082, %v1080
        %v1095 = vpack.c.b16 %v1083, %v1081
        %v1096 = vpack.c.b16 %v1086, %v1084
        %v1097 = vpack.c.b16 %v1087, %v1085
        %v1098 = vpack.c.b16 %v1090, %v1088
        %v1099 = vpack.c.b16 %v1091, %v1089
        %v1109 = vsel %vm514, %v1067, 0
        %1111 = vmatprep.subr.bf16.mxu0 %v1093
        %1112 = vmatpush1.bf16.msra.mxu0 %v1092
        %1113 = vmatprep.subr.bf16.mxu0 %v1095
        %1114 = vmatpush1.bf16.msra.mxu0 %v1094
        %1115 = vmatprep.subr.bf16.mxu0 %v1097
        %1116 = vmatpush1.bf16.msra.mxu0 %v1096
        %1117 = vmatprep.subr.bf16.mxu0 %v1099
        %1118 = vmatpush1.bf16.msra.mxu0 %v1098
        %1119 = vmatprep.subr.bf16.mxu0 0
        %1120 = vmatpush1.bf16.msra.mxu0 0
        %1121 = vmatprep.subr.bf16.mxu0 0
        %1122 = vmatpush1.bf16.msra.mxu0 0
        %1123 = vmatprep.subr.bf16.mxu0 0
        %1124 = vmatpush1.bf16.msra.mxu0 0
        %1125 = vmatprep.subr.bf16.mxu0 0
        %1126 = vmatpush1.bf16.msra.mxu0 0
        %1127 = vmatprep.subr.bf16.mxu0 0
        %1128 = vmatpush1.bf16.msra.mxu0 0
        %1129 = vmatprep.subr.bf16.mxu0 0
        %1130 = vmatpush1.bf16.msra.mxu0 0
        %1131 = vmatprep.subr.bf16.mxu0 0
        %1132 = vmatpush1.bf16.msra.mxu0 0
        %1133 = vmatprep.subr.bf16.mxu0 0
        %1134 = vmatpush1.bf16.msra.mxu0 0
        %1135 = vmatprep.subr.bf16.mxu0 0
        %1136 = vmatpush1.bf16.msra.mxu0 0
        %1137 = vmatprep.subr.bf16.mxu0 0
        %1138 = vmatpush1.bf16.msra.mxu0 0
        %1139 = vmatprep.subr.bf16.mxu0 0
        %1140 = vmatpush1.bf16.msra.mxu0 0
        %1141 = vmatprep.subr.bf16.mxu0 0
        %1142 = vmatpush1.bf16.msra.mxu0 0
        %1143 = vmatprep.mubr.bf16.mxu0 0
        %1144 = vmatmul.mubr.bf16.gmra.mrb[0].mxu0 %v1109
        %v1145 = vpop.f32.mrb[0].mxu0
        %v1146 = vadd.f32 0.0, %v1145
        %v1147 = vpop.f32.mrb[0].mxu0
        %v1148 = vadd.f32 0.0, %v1147
        %v1149 = vpop.f32.mrb[0].mxu0
        %v1150 = vadd.f32 0.0, %v1149
        %v1151 = vpop.f32.mrb[0].mxu0
        %v1152 = vadd.f32 0.0, %v1151
        %1153 = vdwg.mxu0
        %v1154 = vadd.f32 %v1059, %v1146
        %v1155 = vadd.f32 %v1061, %v1148
        %v1156 = vadd.f32 %v1063, %v1150
        %v1157 = vadd.f32 %v1065, %v1152
        %v1158 = vpack.c.bf16 %v760, %v760
        %v1167 = vunpack.c.l.b16 %v439
        %v1168 = vunpack.c.l.b16 %v440
        %v1169 = vunpack.c.l.b16 %v441
        %v1170 = vunpack.c.l.b16 %v442
        %v1171 = vunpack.c.l.b16 %v443
        %v1172 = vunpack.c.l.b16 %v444
        %v1173 = vunpack.c.l.b16 %v445
        %v1174 = vunpack.c.l.b16 %v446
        %v1175 = vpack.c.b16 %v1168, %v1167
        %v1176 = vpack.c.b16 %v1170, %v1169
        %v1177 = vpack.c.b16 %v1172, %v1171
        %v1178 = vpack.c.b16 %v1174, %v1173
        %v1184 = vsel %vm514, %v1158, 0
        %1186 = vmatprep.subr.bf16.mxu0 0
        %1187 = vmatpush1.bf16.msra.mxu0 %v1175
        %1188 = vmatprep.subr.bf16.mxu0 0
        %1189 = vmatpush1.bf16.msra.mxu0 %v1176
        %1190 = vmatprep.subr.bf16.mxu0 0
        %1191 = vmatpush1.bf16.msra.mxu0 %v1177
        %1192 = vmatprep.subr.bf16.mxu0 0
        %1193 = vmatpush1.bf16.msra.mxu0 %v1178
        %1194 = vmatprep.subr.bf16.mxu0 0
        %1195 = vmatpush1.bf16.msra.mxu0 0
        %1196 = vmatprep.subr.bf16.mxu0 0
        %1197 = vmatpush1.bf16.msra.mxu0 0
        %1198 = vmatprep.subr.bf16.mxu0 0
        %1199 = vmatpush1.bf16.msra.mxu0 0
        %1200 = vmatprep.subr.bf16.mxu0 0
        %1201 = vmatpush1.bf16.msra.mxu0 0
        %1202 = vmatprep.subr.bf16.mxu0 0
        %1203 = vmatpush1.bf16.msra.mxu0 0
        %1204 = vmatprep.subr.bf16.mxu0 0
        %1205 = vmatpush1.bf16.msra.mxu0 0
        %1206 = vmatprep.subr.bf16.mxu0 0
        %1207 = vmatpush1.bf16.msra.mxu0 0
        %1208 = vmatprep.subr.bf16.mxu0 0
        %1209 = vmatpush1.bf16.msra.mxu0 0
        %1210 = vmatprep.subr.bf16.mxu0 0
        %1211 = vmatpush1.bf16.msra.mxu0 0
        %1212 = vmatprep.subr.bf16.mxu0 0
        %1213 = vmatpush1.bf16.msra.mxu0 0
        %1214 = vmatprep.subr.bf16.mxu0 0
        %1215 = vmatpush1.bf16.msra.mxu0 0
        %1216 = vmatprep.subr.bf16.mxu0 0
        %1217 = vmatpush1.bf16.msra.mxu0 0
        %1218 = vmatprep.mubr.bf16.mxu0 0
        %1219 = vmatmul.mubr.bf16.gmra.mrb[0].mxu0 %v1184
        %v1220 = vpop.f32.mrb[0].mxu0
        %v1221 = vadd.f32 0.0, %v1220
        %v1222 = vpop.f32.mrb[0].mxu0
        %v1223 = vpop.f32.mrb[0].mxu0
        %v1224 = vpop.f32.mrb[0].mxu0
        %1225 = vdwg.mxu0
        %v1226 = vlaneseq
        %v1227 = vshrl.u32 %v1226, 7
        %v1228 = vsub.s32 0, %v1227
        %v1229 = vrot.slane %v1221, %v1228
        %v1230 = vmul.f32 %v1154, %v1229
        %v1231 = vmul.f32 %v1156, %v1229
        %v1232 = vpack.c.bf16 %v1157, %v1155
        %v1233 = vpack.c.bf16 %v1231, %v1230
        %v1235 = vsel %vm514, %v1232, 0
        %v1238 = vsel %vm514, %v1233, 0
        %1240 = vmatprep.subr.bf16.mxu0 0
        %1241 = vmatpush1.bf16.xpose.msra.mxu0 %v1238
        %1242 = vmatprep.subr.bf16.mxu0 0
        %1243 = vmatpush1.bf16.xpose.msra.mxu0 0
        %1244 = vmatprep.subr.bf16.mxu0 0
        %1245 = vmatpush1.bf16.xpose.msra.mxu0 0
        %1246 = vmatprep.subr.bf16.mxu0 0
        %1247 = vmatpush1.bf16.xpose.msra.mxu0 0
        %1248 = vmatprep.subr.bf16.mxu0 0
        %1249 = vmatpush1.bf16.xpose.msra.mxu0 0
        %1250 = vmatprep.subr.bf16.mxu0 0
        %1251 = vmatpush1.bf16.xpose.msra.mxu0 0
        %1252 = vmatprep.subr.bf16.mxu0 0
        %1253 = vmatpush1.bf16.xpose.msra.mxu0 0
        %1254 = vmatprep.subr.bf16.mxu0 0
        %1255 = vmatpush1.bf16.xpose.msra.mxu0 0
        %1256 = vmatprep.subr.bf16.mxu0 0
        %1257 = vmatpush1.bf16.xpose.msra.mxu0 0
        %1258 = vmatprep.subr.bf16.mxu0 0
        %1259 = vmatpush1.bf16.xpose.msra.mxu0 0
        %1260 = vmatprep.subr.bf16.mxu0 0
        %1261 = vmatpush1.bf16.xpose.msra.mxu0 0
        %1262 = vmatprep.subr.bf16.mxu0 0
        %1263 = vmatpush1.bf16.xpose.msra.mxu0 0
        %1264 = vmatprep.subr.bf16.mxu0 0
        %1265 = vmatpush1.bf16.xpose.msra.mxu0 0
        %1266 = vmatprep.subr.bf16.mxu0 0
        %1267 = vmatpush1.bf16.xpose.msra.mxu0 0
        %1268 = vmatprep.subr.bf16.mxu0 0
        %1269 = vmatpush1.bf16.xpose.msra.mxu0 0
        %1270 = vmatprep.subr.bf16.mxu0 0
        %1271 = vmatpush1.bf16.xpose.msra.mxu0 0
        %1272 = vmatprep.mubr.bf16.mxu0 0
        %1273 = vmatmul.mubr.bf16.gmra.mrb[0].mxu0 %v1235
        %v1274 = vpop.f32.mrb[0].mxu0
        %v1275 = vadd.f32 0.0, %v1274
        %v1276 = vpop.f32.mrb[0].mxu0
        %v1277 = vpop.f32.mrb[0].mxu0
        %v1278 = vadd.f32 0.0, %v1277
        %v1279 = vpop.f32.mrb[0].mxu0
        %1280 = vdwg.mxu0
        %vm1281 = vcmask 130048
        %v1282 = vsel %vm1281, %v1275, -inf
        %1283 = vmax.xlane.f32.xlu0 %v1282
        %v1284 = vpop.xlane.xlu0 %1283
        %v1285 = vsel %vm1281, %v1278, -inf
        %1286 = vmax.xlane.f32.xlu0 %v1285
        %v1287 = vpop.xlane.xlu0 %1286
        %v1288 = vsub.f32 %v1275, %v1284
        %v1289 = vsub.f32 %v1278, %v1287
        %v1290 = vmul.f32 %v1288, 1.442695
        %v1291 = vpow.pop %v1290
        %v1292 = vmul.f32 %v1289, 1.442695
        %v1293 = vpow.pop %v1292
        %v1294 = vsel %vm1281, %v1291, 0.0
        %1295 = vadd.xlane.f32.xlu0 %v1294
        %v1296 = vpop.xlane.xlu0 %1295
        %v1297 = vsel %vm1281, %v1293, 0.0
        %1298 = vadd.xlane.f32.xlu0 %v1297
        %v1299 = vpop.xlane.xlu0 %1298
        %v1300 = vrcp.pop %v1296
        %v1301 = vmul.f32 %v1291, %v1300
        %v1302 = vrcp.pop %v1299
        %v1303 = vmul.f32 %v1293, %v1302
        %v1304 = vpack.c.bf16 %v1303, %v1301
        %1306 = vrot.lane.b32.xlu0 %v1233, 64
        %v1307 = vpop.permute.xlu0 %1306
        %v1310 = vsel %vm1281, %v1304, 0
        %1312 = vmatprep.subr.bf16.mxu0 0
        %1313 = vmatpush1.bf16.msra.mxu0 %v1307
        %1314 = vmatprep.subr.bf16.mxu0 0
        %1315 = vmatpush1.bf16.msra.mxu0 0
        %1316 = vmatprep.subr.bf16.mxu0 0
        %1317 = vmatpush1.bf16.msra.mxu0 0
        %1318 = vmatprep.subr.bf16.mxu0 0
        %1319 = vmatpush1.bf16.msra.mxu0 0
        %1320 = vmatprep.subr.bf16.mxu0 0
        %1321 = vmatpush1.bf16.msra.mxu0 0
        %1322 = vmatprep.subr.bf16.mxu0 0
        %1323 = vmatpush1.bf16.msra.mxu0 0
        %1324 = vmatprep.subr.bf16.mxu0 0
        %1325 = vmatpush1.bf16.msra.mxu0 0
        %1326 = vmatprep.subr.bf16.mxu0 0
        %1327 = vmatpush1.bf16.msra.mxu0 0
        %1328 = vmatprep.subr.bf16.mxu0 0
        %1329 = vmatpush1.bf16.msra.mxu0 0
        %1330 = vmatprep.subr.bf16.mxu0 0
        %1331 = vmatpush1.bf16.msra.mxu0 0
        %1332 = vmatprep.subr.bf16.mxu0 0
        %1333 = vmatpush1.bf16.msra.mxu0 0
        %1334 = vmatprep.subr.bf16.mxu0 0
        %1335 = vmatpush1.bf16.msra.mxu0 0
        %1336 = vmatprep.subr.bf16.mxu0 0
        %1337 = vmatpush1.bf16.msra.mxu0 0
        %1338 = vmatprep.subr.bf16.mxu0 0
        %1339 = vmatpush1.bf16.msra.mxu0 0
        %1340 = vmatprep.subr.bf16.mxu0 0
        %1341 = vmatpush1.bf16.msra.mxu0 0
        %1342 = vmatprep.subr.bf16.mxu0 0
        %1343 = vmatpush1.bf16.msra.mxu0 0
        %1344 = vmatprep.mubr.bf16.mxu0 0
        %1345 = vmatmul.mubr.bf16.gmra.mrb[0].mxu0 %v1310
        %v1346 = vpop.f32.mrb[0].mxu0
        %v1347 = vadd.f32 0.0, %v1346
        %v1348 = vpop.f32.mrb[0].mxu0
        %v1349 = vpop.f32.mrb[0].mxu0
        %v1350 = vadd.f32 0.0, %v1349
        %v1351 = vpop.f32.mrb[0].mxu0
        %1352 = vdwg.mxu0
        %v1353 = vpack.c.bf16 %v1350, %v1347
        %v1362 = vunpack.c.l.b16 %v455
        %v1363 = vunpack.c.l.b16 %v456
        %v1364 = vunpack.c.l.b16 %v457
        %v1365 = vunpack.c.l.b16 %v458
        %v1366 = vunpack.c.l.b16 %v459
        %v1367 = vunpack.c.l.b16 %v460
        %v1368 = vunpack.c.l.b16 %v461
        %v1369 = vunpack.c.l.b16 %v462
        %v1370 = vpack.c.b16 %v1363, %v1362
        %v1371 = vpack.c.b16 %v1365, %v1364
        %v1372 = vpack.c.b16 %v1367, %v1366
        %v1373 = vpack.c.b16 %v1369, %v1368
        %v1379 = vsel %vm514, %v1353, 0
        %1381 = vmatprep.subr.bf16.mxu0 0
        %1382 = vmatpush1.bf16.msra.mxu0 %v1370
        %1383 = vmatprep.subr.bf16.mxu0 0
        %1384 = vmatpush1.bf16.msra.mxu0 %v1371
        %1385 = vmatprep.subr.bf16.mxu0 0
        %1386 = vmatpush1.bf16.msra.mxu0 %v1372
        %1387 = vmatprep.subr.bf16.mxu0 0
        %1388 = vmatpush1.bf16.msra.mxu0 %v1373
        %1389 = vmatprep.subr.bf16.mxu0 0
        %1390 = vmatpush1.bf16.msra.mxu0 0
        %1391 = vmatprep.subr.bf16.mxu0 0
        %1392 = vmatpush1.bf16.msra.mxu0 0
        %1393 = vmatprep.subr.bf16.mxu0 0
        %1394 = vmatpush1.bf16.msra.mxu0 0
        %1395 = vmatprep.subr.bf16.mxu0 0
        %1396 = vmatpush1.bf16.msra.mxu0 0
        %1397 = vmatprep.subr.bf16.mxu0 0
        %1398 = vmatpush1.bf16.msra.mxu0 0
        %1399 = vmatprep.subr.bf16.mxu0 0
        %1400 = vmatpush1.bf16.msra.mxu0 0
        %1401 = vmatprep.subr.bf16.mxu0 0
        %1402 = vmatpush1.bf16.msra.mxu0 0
        %1403 = vmatprep.subr.bf16.mxu0 0
        %1404 = vmatpush1.bf16.msra.mxu0 0
        %1405 = vmatprep.subr.bf16.mxu0 0
        %1406 = vmatpush1.bf16.msra.mxu0 0
        %1407 = vmatprep.subr.bf16.mxu0 0
        %1408 = vmatpush1.bf16.msra.mxu0 0
        %1409 = vmatprep.subr.bf16.mxu0 0
        %1410 = vmatpush1.bf16.msra.mxu0 0
        %1411 = vmatprep.subr.bf16.mxu0 0
        %1412 = vmatpush1.bf16.msra.mxu0 0
        %1413 = vmatprep.mubr.bf16.mxu0 0
        %1414 = vmatmul.mubr.bf16.gmra.mrb[0].mxu0 %v1379
        %v1415 = vpop.f32.mrb[0].mxu0
        %v1416 = vadd.f32 0.0, %v1415
        %v1417 = vpop.f32.mrb[0].mxu0
        %v1418 = vpop.f32.mrb[0].mxu0
        %v1419 = vadd.f32 0.0, %v1418
        %v1420 = vpop.f32.mrb[0].mxu0
        %1421 = vdwg.mxu0
        %v1430 = vunpack.c.l.b16 %v447
        %v1431 = vunpack.c.l.b16 %v448
        %v1432 = vunpack.c.l.b16 %v449
        %v1433 = vunpack.c.l.b16 %v450
        %v1434 = vunpack.c.l.b16 %v451
        %v1435 = vunpack.c.l.b16 %v452
        %v1436 = vunpack.c.l.b16 %v453
        %v1437 = vunpack.c.l.b16 %v454
        %v1438 = vpack.c.b16 %v1431, %v1430
        %v1439 = vpack.c.b16 %v1433, %v1432
        %v1440 = vpack.c.b16 %v1435, %v1434
        %v1441 = vpack.c.b16 %v1437, %v1436
        %1446 = vmatprep.subr.bf16.mxu0 0
        %1447 = vmatpush1.bf16.msra.mxu0 %v1438
        %1448 = vmatprep.subr.bf16.mxu0 0
        %1449 = vmatpush1.bf16.msra.mxu0 %v1439
        %1450 = vmatprep.subr.bf16.mxu0 0
        %1451 = vmatpush1.bf16.msra.mxu0 %v1440
        %1452 = vmatprep.subr.bf16.mxu0 0
        %1453 = vmatpush1.bf16.msra.mxu0 %v1441
        %1454 = vmatprep.subr.bf16.mxu0 0
        %1455 = vmatpush1.bf16.msra.mxu0 0
        %1456 = vmatprep.subr.bf16.mxu0 0
        %1457 = vmatpush1.bf16.msra.mxu0 0
        %1458 = vmatprep.subr.bf16.mxu0 0
        %1459 = vmatpush1.bf16.msra.mxu0 0
        %1460 = vmatprep.subr.bf16.mxu0 0
        %1461 = vmatpush1.bf16.msra.mxu0 0
        %1462 = vmatprep.subr.bf16.mxu0 0
        %1463 = vmatpush1.bf16.msra.mxu0 0
        %1464 = vmatprep.subr.bf16.mxu0 0
        %1465 = vmatpush1.bf16.msra.mxu0 0
        %1466 = vmatprep.subr.bf16.mxu0 0
        %1467 = vmatpush1.bf16.msra.mxu0 0
        %1468 = vmatprep.subr.bf16.mxu0 0
        %1469 = vmatpush1.bf16.msra.mxu0 0
        %1470 = vmatprep.subr.bf16.mxu0 0
        %1471 = vmatpush1.bf16.msra.mxu0 0
        %1472 = vmatprep.subr.bf16.mxu0 0
        %1473 = vmatpush1.bf16.msra.mxu0 0
        %1474 = vmatprep.subr.bf16.mxu0 0
        %1475 = vmatpush1.bf16.msra.mxu0 0
        %1476 = vmatprep.subr.bf16.mxu0 0
        %1477 = vmatpush1.bf16.msra.mxu0 0
        %1478 = vmatprep.mubr.bf16.mxu0 0
        %1479 = vmatmul.mubr.bf16.gmra.mrb[0].mxu0 %v856
        %v1480 = vpop.f32.mrb[0].mxu0
        %v1481 = vadd.f32 %v1416, %v1480
        %v1482 = vpop.f32.mrb[0].mxu0
        %v1483 = vpop.f32.mrb[0].mxu0
        %v1484 = vadd.f32 %v1419, %v1483
        %v1485 = vpop.f32.mrb[0].mxu0
        %1486 = vdwg.mxu0
        %s1487 = scalar_lea.vmem %s4, 96
        %v1488 = vld [vmem:[%s1487] sm:$0xf]
        %v1489 = vld [vmem:[%s1487 + $0x4] sm:$0xf]
        %v1490 = vld [vmem:[%s1487 + $0x8] sm:$0xf]
        %v1491 = vld [vmem:[%s1487 + $0xc] sm:$0xf]
        %v1492 = vld [vmem:[%s1487 + $0x10] sm:$0xf]
        %v1493 = vld [vmem:[%s1487 + $0x14] sm:$0xf]
        %v1494 = vld [vmem:[%s1487 + $0x18] sm:$0xf]
        %v1495 = vld [vmem:[%s1487 + $0x1c] sm:$0xf]
        %v1504 = vunpack.c.l.b16 %v1488
        %v1505 = vunpack.c.l.b16 %v1489
        %v1506 = vunpack.c.l.b16 %v1490
        %v1507 = vunpack.c.l.b16 %v1491
        %v1508 = vunpack.c.l.b16 %v1492
        %v1509 = vunpack.c.l.b16 %v1493
        %v1510 = vunpack.c.l.b16 %v1494
        %v1511 = vunpack.c.l.b16 %v1495
        %v1512 = vpack.c.b16 %v1505, %v1504
        %v1513 = vpack.c.b16 %v1507, %v1506
        %v1514 = vpack.c.b16 %v1509, %v1508
        %v1515 = vpack.c.b16 %v1511, %v1510
        %1520 = vmatprep.subr.bf16.mxu0 0
        %1521 = vmatpush1.bf16.msra.mxu0 %v1512
        %1522 = vmatprep.subr.bf16.mxu0 0
        %1523 = vmatpush1.bf16.msra.mxu0 %v1513
        %1524 = vmatprep.subr.bf16.mxu0 0
        %1525 = vmatpush1.bf16.msra.mxu0 %v1514
        %1526 = vmatprep.subr.bf16.mxu0 0
        %1527 = vmatpush1.bf16.msra.mxu0 %v1515
        %1528 = vmatprep.subr.bf16.mxu0 0
        %1529 = vmatpush1.bf16.msra.mxu0 0
        %1530 = vmatprep.subr.bf16.mxu0 0
        %1531 = vmatpush1.bf16.msra.mxu0 0
        %1532 = vmatprep.subr.bf16.mxu0 0
        %1533 = vmatpush1.bf16.msra.mxu0 0
        %1534 = vmatprep.subr.bf16.mxu0 0
        %1535 = vmatpush1.bf16.msra.mxu0 0
        %1536 = vmatprep.subr.bf16.mxu0 0
        %1537 = vmatpush1.bf16.msra.mxu0 0
        %1538 = vmatprep.subr.bf16.mxu0 0
        %1539 = vmatpush1.bf16.msra.mxu0 0
        %1540 = vmatprep.subr.bf16.mxu0 0
        %1541 = vmatpush1.bf16.msra.mxu0 0
        %1542 = vmatprep.subr.bf16.mxu0 0
        %1543 = vmatpush1.bf16.msra.mxu0 0
        %1544 = vmatprep.subr.bf16.mxu0 0
        %1545 = vmatpush1.bf16.msra.mxu0 0
        %1546 = vmatprep.subr.bf16.mxu0 0
        %1547 = vmatpush1.bf16.msra.mxu0 0
        %1548 = vmatprep.subr.bf16.mxu0 0
        %1549 = vmatpush1.bf16.msra.mxu0 0
        %1550 = vmatprep.subr.bf16.mxu0 0
        %1551 = vmatpush1.bf16.msra.mxu0 0
        %1552 = vmatprep.mubr.bf16.mxu0 0
        %1553 = vmatmul.mubr.bf16.gmra.mrb[0].mxu0 %v672
        %v1554 = vpop.f32.mrb[0].mxu0
        %v1555 = vadd.f32 0.0, %v1554
        %v1556 = vpop.f32.mrb[0].mxu0
        %v1557 = vpop.f32.mrb[0].mxu0
        %v1558 = vpop.f32.mrb[0].mxu0
        %1559 = vdwg.mxu0
        %v1560 = vlaneseq
        %v1561 = vshrl.u32 %v1560, 7
        %v1562 = vsub.s32 0, %v1561
        %v1563 = vrot.slane %v1555, %v1562
        %v1564 = vmul.f32 %v564, %v1563
        %v1565 = vmul.f32 %v1564, %v722
        %v1566 = vsel %vm514, %v1565, 0.0
        %1567 = vadd.xlane.f32.xlu0 %v1566
        %v1568 = vpop.xlane.xlu0 %1567
        %v1569 = vadd.f32 %v1568, %v567
        %v1570 = vsel %vm728, %v1569, -inf
        %v1571 = vrot.slane %v1570, 4
        %v1572 = vmax.f32 %v1570, %v1571
        %v1573 = vrot.slane %v1572, 2
        %v1574 = vmax.f32 %v1572, %v1573
        %v1575 = vrot.slane %v1574, 1
        %v1576 = vmax.f32 %v1574, %v1575
        %v1577 = vsub.f32 %v1569, %v1576
        %v1578 = vmul.f32 %v1577, 1.442695
        %v1579 = vpow.pop %v1578
        %v1580 = vsel %vm728, %v1579, 0.0
        %v1581 = vrot.slane %v1580, 4
        %v1582 = vadd.f32 %v1580, %v1581
        %v1583 = vrot.slane %v1582, 2
        %v1584 = vadd.f32 %v1582, %v1583
        %v1585 = vrot.slane %v1584, 1
        %v1586 = vadd.f32 %v1584, %v1585
        %v1587 = vrcp.pop %v1586
        %v1588 = vmul.f32 %v1579, %v1587
        %1590 = vset.pattern.permute.xlu0 0
        %1591 = vperm.xlu0 %1590, %v1588
        %v1592 = vpop.permute.xlu0 %1591
        %v1594 = vmul.f32 %v1592, %v564
        %v1595 = vsel %vm514, %v1594, 0.0
        %v1596 = vrot.slane %v1595, 4
        %v1597 = vadd.f32 %v1595, %v1596
        %v1598 = vrot.slane %v1597, 2
        %v1599 = vadd.f32 %v1597, %v1598
        %v1600 = vrot.slane %v1599, 1
        %v1601 = vadd.f32 %v1599, %v1600
        %v1602 = vpack.c.bf16 %v1484, %v1481
        %v1604 = vsel %vm514, %v1602, 0
        %1606 = vmatprep.subr.bf16.mxu0 0
        %1607 = vmatpush1.bf16.msra.mxu0 %v847
        %1608 = vmatprep.subr.bf16.mxu0 0
        %1609 = vmatpush1.bf16.msra.mxu0 %v848
        %1610 = vmatprep.subr.bf16.mxu0 0
        %1611 = vmatpush1.bf16.msra.mxu0 %v849
        %1612 = vmatprep.subr.bf16.mxu0 0
        %1613 = vmatpush1.bf16.msra.mxu0 %v850
        %1614 = vmatprep.subr.bf16.mxu0 0
        %1615 = vmatpush1.bf16.msra.mxu0 0
        %1616 = vmatprep.subr.bf16.mxu0 0
        %1617 = vmatpush1.bf16.msra.mxu0 0
        %1618 = vmatprep.subr.bf16.mxu0 0
        %1619 = vmatpush1.bf16.msra.mxu0 0
        %1620 = vmatprep.subr.bf16.mxu0 0
        %1621 = vmatpush1.bf16.msra.mxu0 0
        %1622 = vmatprep.subr.bf16.mxu0 0
        %1623 = vmatpush1.bf16.msra.mxu0 0
        %1624 = vmatprep.subr.bf16.mxu0 0
        %1625 = vmatpush1.bf16.msra.mxu0 0
        %1626 = vmatprep.subr.bf16.mxu0 0
        %1627 = vmatpush1.bf16.msra.mxu0 0
        %1628 = vmatprep.subr.bf16.mxu0 0
        %1629 = vmatpush1.bf16.msra.mxu0 0
        %1630 = vmatprep.subr.bf16.mxu0 0
        %1631 = vmatpush1.bf16.msra.mxu0 0
        %1632 = vmatprep.subr.bf16.mxu0 0
        %1633 = vmatpush1.bf16.msra.mxu0 0
        %1634 = vmatprep.subr.bf16.mxu0 0
        %1635 = vmatpush1.bf16.msra.mxu0 0
        %1636 = vmatprep.subr.bf16.mxu0 0
        %1637 = vmatpush1.bf16.msra.mxu0 0
        %1638 = vmatprep.mubr.bf16.mxu0 0
        %1639 = vmatmul.mubr.bf16.gmra.mrb[0].mxu0 %v1604
        %v1640 = vpop.f32.mrb[0].mxu0
        %v1641 = vadd.f32 0.0, %v1640
        %v1642 = vpop.f32.mrb[0].mxu0
        %v1643 = vpop.f32.mrb[0].mxu0
        %v1644 = vadd.f32 0.0, %v1643
        %v1645 = vpop.f32.mrb[0].mxu0
        %1646 = vdwg.mxu0
        %v1647 = vmul.f32 %v824, %v1641
        %v1648 = vmul.f32 %v827, %v1644
        %1649 = vmatprep.subr.bf16.mxu0 %v926
        %1650 = vmatpush1.bf16.msra.mxu0 %v925
        %1651 = vmatprep.subr.bf16.mxu0 %v928
        %1652 = vmatpush1.bf16.msra.mxu0 %v927
        %1653 = vmatprep.subr.bf16.mxu0 %v930
        %1654 = vmatpush1.bf16.msra.mxu0 %v929
        %1655 = vmatprep.subr.bf16.mxu0 %v932
        %1656 = vmatpush1.bf16.msra.mxu0 %v931
        %1657 = vmatprep.subr.bf16.mxu0 0
        %1658 = vmatpush1.bf16.msra.mxu0 0
        %1659 = vmatprep.subr.bf16.mxu0 0
        %1660 = vmatpush1.bf16.msra.mxu0 0
        %1661 = vmatprep.subr.bf16.mxu0 0
        %1662 = vmatpush1.bf16.msra.mxu0 0
        %1663 = vmatprep.subr.bf16.mxu0 0
        %1664 = vmatpush1.bf16.msra.mxu0 0
        %1665 = vmatprep.subr.bf16.mxu0 0
        %1666 = vmatpush1.bf16.msra.mxu0 0
        %1667 = vmatprep.subr.bf16.mxu0 0
        %1668 = vmatpush1.bf16.msra.mxu0 0
        %1669 = vmatprep.subr.bf16.mxu0 0
        %1670 = vmatpush1.bf16.msra.mxu0 0
        %1671 = vmatprep.subr.bf16.mxu0 0
        %1672 = vmatpush1.bf16.msra.mxu0 0
        %1673 = vmatprep.subr.bf16.mxu0 0
        %1674 = vmatpush1.bf16.msra.mxu0 0
        %1675 = vmatprep.subr.bf16.mxu0 0
        %1676 = vmatpush1.bf16.msra.mxu0 0
        %1677 = vmatprep.subr.bf16.mxu0 0
        %1678 = vmatpush1.bf16.msra.mxu0 0
        %1679 = vmatprep.subr.bf16.mxu0 0
        %1680 = vmatpush1.bf16.msra.mxu0 0
        %1681 = vmatprep.mubr.bf16.mxu0 0
        %1682 = vmatmul.mubr.bf16.gmra.mrb[0].mxu0 %v1604
        %v1683 = vpop.f32.mrb[0].mxu0
        %v1684 = vadd.f32 0.0, %v1683
        %v1685 = vpop.f32.mrb[0].mxu0
        %v1686 = vadd.f32 0.0, %v1685
        %v1687 = vpop.f32.mrb[0].mxu0
        %v1688 = vadd.f32 0.0, %v1687
        %v1689 = vpop.f32.mrb[0].mxu0
        %v1690 = vadd.f32 0.0, %v1689
        %1691 = vdwg.mxu0
        %1692 = vmatprep.subr.bf16.mxu0 %v1009
        %1693 = vmatpush1.bf16.msra.mxu0 %v1008
        %1694 = vmatprep.subr.bf16.mxu0 %v1011
        %1695 = vmatpush1.bf16.msra.mxu0 %v1010
        %1696 = vmatprep.subr.bf16.mxu0 %v1013
        %1697 = vmatpush1.bf16.msra.mxu0 %v1012
        %1698 = vmatprep.subr.bf16.mxu0 %v1015
        %1699 = vmatpush1.bf16.msra.mxu0 %v1014
        %1700 = vmatprep.subr.bf16.mxu0 0
        %1701 = vmatpush1.bf16.msra.mxu0 0
        %1702 = vmatprep.subr.bf16.mxu0 0
        %1703 = vmatpush1.bf16.msra.mxu0 0
        %1704 = vmatprep.subr.bf16.mxu0 0
        %1705 = vmatpush1.bf16.msra.mxu0 0
        %1706 = vmatprep.subr.bf16.mxu0 0
        %1707 = vmatpush1.bf16.msra.mxu0 0
        %1708 = vmatprep.subr.bf16.mxu0 0
        %1709 = vmatpush1.bf16.msra.mxu0 0
        %1710 = vmatprep.subr.bf16.mxu0 0
        %1711 = vmatpush1.bf16.msra.mxu0 0
        %1712 = vmatprep.subr.bf16.mxu0 0
        %1713 = vmatpush1.bf16.msra.mxu0 0
        %1714 = vmatprep.subr.bf16.mxu0 0
        %1715 = vmatpush1.bf16.msra.mxu0 0
        %1716 = vmatprep.subr.bf16.mxu0 0
        %1717 = vmatpush1.bf16.msra.mxu0 0
        %1718 = vmatprep.subr.bf16.mxu0 0
        %1719 = vmatpush1.bf16.msra.mxu0 0
        %1720 = vmatprep.subr.bf16.mxu0 0
        %1721 = vmatpush1.bf16.msra.mxu0 0
        %1722 = vmatprep.subr.bf16.mxu0 0
        %1723 = vmatpush1.bf16.msra.mxu0 0
        %1724 = vmatprep.mubr.bf16.mxu0 0
        %1725 = vmatmul.mubr.bf16.gmra.mrb[0].mxu0 %v787
        %v1726 = vpop.f32.mrb[0].mxu0
        %v1727 = vadd.f32 %v1684, %v1726
        %v1728 = vpop.f32.mrb[0].mxu0
        %v1729 = vadd.f32 %v1686, %v1728
        %v1730 = vpop.f32.mrb[0].mxu0
        %v1731 = vadd.f32 %v1688, %v1730
        %v1732 = vpop.f32.mrb[0].mxu0
        %v1733 = vadd.f32 %v1690, %v1732
        %1734 = vdwg.mxu0
        %v1735 = vpack.c.bf16 %v1648, %v1647
        %v1737 = vsel %vm514, %v1735, 0
        %1739 = vmatprep.subr.bf16.mxu0 %v1093
        %1740 = vmatpush1.bf16.msra.mxu0 %v1092
        %1741 = vmatprep.subr.bf16.mxu0 %v1095
        %1742 = vmatpush1.bf16.msra.mxu0 %v1094
        %1743 = vmatprep.subr.bf16.mxu0 %v1097
        %1744 = vmatpush1.bf16.msra.mxu0 %v1096
        %1745 = vmatprep.subr.bf16.mxu0 %v1099
        %1746 = vmatpush1.bf16.msra.mxu0 %v1098
        %1747 = vmatprep.subr.bf16.mxu0 0
        %1748 = vmatpush1.bf16.msra.mxu0 0
        %1749 = vmatprep.subr.bf16.mxu0 0
        %1750 = vmatpush1.bf16.msra.mxu0 0
        %1751 = vmatprep.subr.bf16.mxu0 0
        %1752 = vmatpush1.bf16.msra.mxu0 0
        %1753 = vmatprep.subr.bf16.mxu0 0
        %1754 = vmatpush1.bf16.msra.mxu0 0
        %1755 = vmatprep.subr.bf16.mxu0 0
        %1756 = vmatpush1.bf16.msra.mxu0 0
        %1757 = vmatprep.subr.bf16.mxu0 0
        %1758 = vmatpush1.bf16.msra.mxu0 0
        %1759 = vmatprep.subr.bf16.mxu0 0
        %1760 = vmatpush1.bf16.msra.mxu0 0
        %1761 = vmatprep.subr.bf16.mxu0 0
        %1762 = vmatpush1.bf16.msra.mxu0 0
        %1763 = vmatprep.subr.bf16.mxu0 0
        %1764 = vmatpush1.bf16.msra.mxu0 0
        %1765 = vmatprep.subr.bf16.mxu0 0
        %1766 = vmatpush1.bf16.msra.mxu0 0
        %1767 = vmatprep.subr.bf16.mxu0 0
        %1768 = vmatpush1.bf16.msra.mxu0 0
        %1769 = vmatprep.subr.bf16.mxu0 0
        %1770 = vmatpush1.bf16.msra.mxu0 0
        %1771 = vmatprep.mubr.bf16.mxu0 0
        %1772 = vmatmul.mubr.bf16.gmra.mrb[0].mxu0 %v1737
        %v1773 = vpop.f32.mrb[0].mxu0
        %v1774 = vadd.f32 0.0, %v1773
        %v1775 = vpop.f32.mrb[0].mxu0
        %v1776 = vadd.f32 0.0, %v1775
        %v1777 = vpop.f32.mrb[0].mxu0
        %v1778 = vadd.f32 0.0, %v1777
        %v1779 = vpop.f32.mrb[0].mxu0
        %v1780 = vadd.f32 0.0, %v1779
        %1781 = vdwg.mxu0
        %v1782 = vadd.f32 %v1727, %v1774
        %v1783 = vadd.f32 %v1729, %v1776
        %v1784 = vadd.f32 %v1731, %v1778
        %v1785 = vadd.f32 %v1733, %v1780
        %v1786 = vpack.c.bf16 %v1601, %v1601
        %v1788 = vsel %vm514, %v1786, 0
        %1790 = vmatprep.subr.bf16.mxu0 0
        %1791 = vmatpush1.bf16.msra.mxu0 %v1175
        %1792 = vmatprep.subr.bf16.mxu0 0
        %1793 = vmatpush1.bf16.msra.mxu0 %v1176
        %1794 = vmatprep.subr.bf16.mxu0 0
        %1795 = vmatpush1.bf16.msra.mxu0 %v1177
        %1796 = vmatprep.subr.bf16.mxu0 0
        %1797 = vmatpush1.bf16.msra.mxu0 %v1178
        %1798 = vmatprep.subr.bf16.mxu0 0
        %1799 = vmatpush1.bf16.msra.mxu0 0
        %1800 = vmatprep.subr.bf16.mxu0 0
        %1801 = vmatpush1.bf16.msra.mxu0 0
        %1802 = vmatprep.subr.bf16.mxu0 0
        %1803 = vmatpush1.bf16.msra.mxu0 0
        %1804 = vmatprep.subr.bf16.mxu0 0
        %1805 = vmatpush1.bf16.msra.mxu0 0
        %1806 = vmatprep.subr.bf16.mxu0 0
        %1807 = vmatpush1.bf16.msra.mxu0 0
        %1808 = vmatprep.subr.bf16.mxu0 0
        %1809 = vmatpush1.bf16.msra.mxu0 0
        %1810 = vmatprep.subr.bf16.mxu0 0
        %1811 = vmatpush1.bf16.msra.mxu0 0
        %1812 = vmatprep.subr.bf16.mxu0 0
        %1813 = vmatpush1.bf16.msra.mxu0 0
        %1814 = vmatprep.subr.bf16.mxu0 0
        %1815 = vmatpush1.bf16.msra.mxu0 0
        %1816 = vmatprep.subr.bf16.mxu0 0
        %1817 = vmatpush1.bf16.msra.mxu0 0
        %1818 = vmatprep.subr.bf16.mxu0 0
        %1819 = vmatpush1.bf16.msra.mxu0 0
        %1820 = vmatprep.subr.bf16.mxu0 0
        %1821 = vmatpush1.bf16.msra.mxu0 0
        %1822 = vmatprep.mubr.bf16.mxu0 0
        %1823 = vmatmul.mubr.bf16.gmra.mrb[0].mxu0 %v1788
        %v1824 = vpop.f32.mrb[0].mxu0
        %v1825 = vadd.f32 0.0, %v1824
        %v1826 = vpop.f32.mrb[0].mxu0
        %v1827 = vpop.f32.mrb[0].mxu0
        %v1828 = vpop.f32.mrb[0].mxu0
        %1829 = vdwg.mxu0
        %v1830 = vlaneseq
        %v1831 = vshrl.u32 %v1830, 7
        %v1832 = vsub.s32 0, %v1831
        %v1833 = vrot.slane %v1825, %v1832
        %v1834 = vmul.f32 %v1782, %v1833
        %v1835 = vmul.f32 %v1784, %v1833
        %v1836 = vpack.c.bf16 %v1785, %v1783
        %v1837 = vpack.c.bf16 %v1835, %v1834
        %v1839 = vsel %vm514, %v1836, 0
        %v1842 = vsel %vm514, %v1837, 0
        %1844 = vmatprep.subr.bf16.mxu0 0
        %1845 = vmatpush1.bf16.xpose.msra.mxu0 %v1842
        %1846 = vmatprep.subr.bf16.mxu0 0
        %1847 = vmatpush1.bf16.xpose.msra.mxu0 0
        %1848 = vmatprep.subr.bf16.mxu0 0
        %1849 = vmatpush1.bf16.xpose.msra.mxu0 0
        %1850 = vmatprep.subr.bf16.mxu0 0
        %1851 = vmatpush1.bf16.xpose.msra.mxu0 0
        %1852 = vmatprep.subr.bf16.mxu0 0
        %1853 = vmatpush1.bf16.xpose.msra.mxu0 0
        %1854 = vmatprep.subr.bf16.mxu0 0
        %1855 = vmatpush1.bf16.xpose.msra.mxu0 0
        %1856 = vmatprep.subr.bf16.mxu0 0
        %1857 = vmatpush1.bf16.xpose.msra.mxu0 0
        %1858 = vmatprep.subr.bf16.mxu0 0
        %1859 = vmatpush1.bf16.xpose.msra.mxu0 0
        %1860 = vmatprep.subr.bf16.mxu0 0
        %1861 = vmatpush1.bf16.xpose.msra.mxu0 0
        %1862 = vmatprep.subr.bf16.mxu0 0
        %1863 = vmatpush1.bf16.xpose.msra.mxu0 0
        %1864 = vmatprep.subr.bf16.mxu0 0
        %1865 = vmatpush1.bf16.xpose.msra.mxu0 0
        %1866 = vmatprep.subr.bf16.mxu0 0
        %1867 = vmatpush1.bf16.xpose.msra.mxu0 0
        %1868 = vmatprep.subr.bf16.mxu0 0
        %1869 = vmatpush1.bf16.xpose.msra.mxu0 0
        %1870 = vmatprep.subr.bf16.mxu0 0
        %1871 = vmatpush1.bf16.xpose.msra.mxu0 0
        %1872 = vmatprep.subr.bf16.mxu0 0
        %1873 = vmatpush1.bf16.xpose.msra.mxu0 0
        %1874 = vmatprep.subr.bf16.mxu0 0
        %1875 = vmatpush1.bf16.xpose.msra.mxu0 0
        %1876 = vmatprep.mubr.bf16.mxu0 0
        %1877 = vmatmul.mubr.bf16.gmra.mrb[0].mxu0 %v1839
        %v1878 = vpop.f32.mrb[0].mxu0
        %v1879 = vadd.f32 0.0, %v1878
        %v1880 = vpop.f32.mrb[0].mxu0
        %v1881 = vpop.f32.mrb[0].mxu0
        %v1882 = vadd.f32 0.0, %v1881
        %v1883 = vpop.f32.mrb[0].mxu0
        %1884 = vdwg.mxu0
        %v1885 = vsel %vm1281, %v1879, -inf
        %1886 = vmax.xlane.f32.xlu0 %v1885
        %v1887 = vpop.xlane.xlu0 %1886
        %v1888 = vsel %vm1281, %v1882, -inf
        %1889 = vmax.xlane.f32.xlu0 %v1888
        %v1890 = vpop.xlane.xlu0 %1889
        %v1891 = vsub.f32 %v1879, %v1887
        %v1892 = vsub.f32 %v1882, %v1890
        %v1893 = vmul.f32 %v1891, 1.442695
        %v1894 = vpow.pop %v1893
        %v1895 = vmul.f32 %v1892, 1.442695
        %v1896 = vpow.pop %v1895
        %v1897 = vsel %vm1281, %v1894, 0.0
        %1898 = vadd.xlane.f32.xlu0 %v1897
        %v1899 = vpop.xlane.xlu0 %1898
        %v1900 = vsel %vm1281, %v1896, 0.0
        %1901 = vadd.xlane.f32.xlu0 %v1900
        %v1902 = vpop.xlane.xlu0 %1901
        %v1903 = vrcp.pop %v1899
        %v1904 = vmul.f32 %v1894, %v1903
        %v1905 = vrcp.pop %v1902
        %v1906 = vmul.f32 %v1896, %v1905
        %v1907 = vpack.c.bf16 %v1906, %v1904
        %1909 = vrot.lane.b32.xlu0 %v1837, 64
        %v1910 = vpop.permute.xlu0 %1909
        %v1913 = vsel %vm1281, %v1907, 0
        %1915 = vmatprep.subr.bf16.mxu0 0
        %1916 = vmatpush1.bf16.msra.mxu0 %v1910
        %1917 = vmatprep.subr.bf16.mxu0 0
        %1918 = vmatpush1.bf16.msra.mxu0 0
        %1919 = vmatprep.subr.bf16.mxu0 0
        %1920 = vmatpush1.bf16.msra.mxu0 0
        %1921 = vmatprep.subr.bf16.mxu0 0
        %1922 = vmatpush1.bf16.msra.mxu0 0
        %1923 = vmatprep.subr.bf16.mxu0 0
        %1924 = vmatpush1.bf16.msra.mxu0 0
        %1925 = vmatprep.subr.bf16.mxu0 0
        %1926 = vmatpush1.bf16.msra.mxu0 0
        %1927 = vmatprep.subr.bf16.mxu0 0
        %1928 = vmatpush1.bf16.msra.mxu0 0
        %1929 = vmatprep.subr.bf16.mxu0 0
        %1930 = vmatpush1.bf16.msra.mxu0 0
        %1931 = vmatprep.subr.bf16.mxu0 0
        %1932 = vmatpush1.bf16.msra.mxu0 0
        %1933 = vmatprep.subr.bf16.mxu0 0
        %1934 = vmatpush1.bf16.msra.mxu0 0
        %1935 = vmatprep.subr.bf16.mxu0 0
        %1936 = vmatpush1.bf16.msra.mxu0 0
        %1937 = vmatprep.subr.bf16.mxu0 0
        %1938 = vmatpush1.bf16.msra.mxu0 0
        %1939 = vmatprep.subr.bf16.mxu0 0
        %1940 = vmatpush1.bf16.msra.mxu0 0
        %1941 = vmatprep.subr.bf16.mxu0 0
        %1942 = vmatpush1.bf16.msra.mxu0 0
        %1943 = vmatprep.subr.bf16.mxu0 0
        %1944 = vmatpush1.bf16.msra.mxu0 0
        %1945 = vmatprep.subr.bf16.mxu0 0
        %1946 = vmatpush1.bf16.msra.mxu0 0
        %1947 = vmatprep.mubr.bf16.mxu0 0
        %1948 = vmatmul.mubr.bf16.gmra.mrb[0].mxu0 %v1913
        %v1949 = vpop.f32.mrb[0].mxu0
        %v1950 = vadd.f32 0.0, %v1949
        %v1951 = vpop.f32.mrb[0].mxu0
        %v1952 = vpop.f32.mrb[0].mxu0
        %v1953 = vadd.f32 0.0, %v1952
        %v1954 = vpop.f32.mrb[0].mxu0
        %1955 = vdwg.mxu0
        %v1956 = vpack.c.bf16 %v1953, %v1950
        %v1958 = vsel %vm514, %v1956, 0
        %1960 = vmatprep.subr.bf16.mxu0 0
        %1961 = vmatpush1.bf16.msra.mxu0 %v1370
        %1962 = vmatprep.subr.bf16.mxu0 0
        %1963 = vmatpush1.bf16.msra.mxu0 %v1371
        %1964 = vmatprep.subr.bf16.mxu0 0
        %1965 = vmatpush1.bf16.msra.mxu0 %v1372
        %1966 = vmatprep.subr.bf16.mxu0 0
        %1967 = vmatpush1.bf16.msra.mxu0 %v1373
        %1968 = vmatprep.subr.bf16.mxu0 0
        %1969 = vmatpush1.bf16.msra.mxu0 0
        %1970 = vmatprep.subr.bf16.mxu0 0
        %1971 = vmatpush1.bf16.msra.mxu0 0
        %1972 = vmatprep.subr.bf16.mxu0 0
        %1973 = vmatpush1.bf16.msra.mxu0 0
        %1974 = vmatprep.subr.bf16.mxu0 0
        %1975 = vmatpush1.bf16.msra.mxu0 0
        %1976 = vmatprep.subr.bf16.mxu0 0
        %1977 = vmatpush1.bf16.msra.mxu0 0
        %1978 = vmatprep.subr.bf16.mxu0 0
        %1979 = vmatpush1.bf16.msra.mxu0 0
        %1980 = vmatprep.subr.bf16.mxu0 0
        %1981 = vmatpush1.bf16.msra.mxu0 0
        %1982 = vmatprep.subr.bf16.mxu0 0
        %1983 = vmatpush1.bf16.msra.mxu0 0
        %1984 = vmatprep.subr.bf16.mxu0 0
        %1985 = vmatpush1.bf16.msra.mxu0 0
        %1986 = vmatprep.subr.bf16.mxu0 0
        %1987 = vmatpush1.bf16.msra.mxu0 0
        %1988 = vmatprep.subr.bf16.mxu0 0
        %1989 = vmatpush1.bf16.msra.mxu0 0
        %1990 = vmatprep.subr.bf16.mxu0 0
        %1991 = vmatpush1.bf16.msra.mxu0 0
        %1992 = vmatprep.mubr.bf16.mxu0 0
        %1993 = vmatmul.mubr.bf16.gmra.mrb[0].mxu0 %v1958
        %v1994 = vpop.f32.mrb[0].mxu0
        %v1995 = vadd.f32 0.0, %v1994
        %v1996 = vpop.f32.mrb[0].mxu0
        %v1997 = vpop.f32.mrb[0].mxu0
        %v1998 = vadd.f32 0.0, %v1997
        %v1999 = vpop.f32.mrb[0].mxu0
        %2000 = vdwg.mxu0
        %2001 = vmatprep.subr.bf16.mxu0 0
        %2002 = vmatpush1.bf16.msra.mxu0 %v1438
        %2003 = vmatprep.subr.bf16.mxu0 0
        %2004 = vmatpush1.bf16.msra.mxu0 %v1439
        %2005 = vmatprep.subr.bf16.mxu0 0
        %2006 = vmatpush1.bf16.msra.mxu0 %v1440
        %2007 = vmatprep.subr.bf16.mxu0 0
        %2008 = vmatpush1.bf16.msra.mxu0 %v1441
        %2009 = vmatprep.subr.bf16.mxu0 0
        %2010 = vmatpush1.bf16.msra.mxu0 0
        %2011 = vmatprep.subr.bf16.mxu0 0
        %2012 = vmatpush1.bf16.msra.mxu0 0
        %2013 = vmatprep.subr.bf16.mxu0 0
        %2014 = vmatpush1.bf16.msra.mxu0 0
        %2015 = vmatprep.subr.bf16.mxu0 0
        %2016 = vmatpush1.bf16.msra.mxu0 0
        %2017 = vmatprep.subr.bf16.mxu0 0
        %2018 = vmatpush1.bf16.msra.mxu0 0
        %2019 = vmatprep.subr.bf16.mxu0 0
        %2020 = vmatpush1.bf16.msra.mxu0 0
        %2021 = vmatprep.subr.bf16.mxu0 0
        %2022 = vmatpush1.bf16.msra.mxu0 0
        %2023 = vmatprep.subr.bf16.mxu0 0
        %2024 = vmatpush1.bf16.msra.mxu0 0
        %2025 = vmatprep.subr.bf16.mxu0 0
        %2026 = vmatpush1.bf16.msra.mxu0 0
        %2027 = vmatprep.subr.bf16.mxu0 0
        %2028 = vmatpush1.bf16.msra.mxu0 0
        %2029 = vmatprep.subr.bf16.mxu0 0
        %2030 = vmatpush1.bf16.msra.mxu0 0
        %2031 = vmatprep.subr.bf16.mxu0 0
        %2032 = vmatpush1.bf16.msra.mxu0 0
        %2033 = vmatprep.mubr.bf16.mxu0 0
        %2034 = vmatmul.mubr.bf16.gmra.mrb[0].mxu0 %v1604
        %v2035 = vpop.f32.mrb[0].mxu0
        %v2036 = vadd.f32 %v1995, %v2035
        %v2037 = vpop.f32.mrb[0].mxu0
        %v2038 = vpop.f32.mrb[0].mxu0
        %v2039 = vadd.f32 %v1998, %v2038
        %v2040 = vpop.f32.mrb[0].mxu0
        %2041 = vdwg.mxu0
        %v2042 = vpack.c.bf16 %v2039, %v2036
        %v2051 = vunpack.c.l.b16 %v472
        %v2052 = vunpack.c.l.b16 %v473
        %v2053 = vunpack.c.l.b16 %v474
        %v2054 = vunpack.c.l.b16 %v475
        %v2055 = vunpack.c.l.b16 %v476
        %v2056 = vunpack.c.l.b16 %v477
        %v2057 = vunpack.c.l.b16 %v478
        %v2058 = vunpack.c.l.b16 %v479
        %v2059 = vpack.c.b16 %v2052, %v2051
        %v2060 = vpack.c.b16 %v2054, %v2053
        %v2061 = vpack.c.b16 %v2056, %v2055
        %v2062 = vpack.c.b16 %v2058, %v2057
        %v2068 = vsel %vm514, %v2042, 0
        %2070 = vmatprep.subr.bf16.mxu0 0
        %2071 = vmatpush1.bf16.msra.mxu0 %v2059
        %2072 = vmatprep.subr.bf16.mxu0 0
        %2073 = vmatpush1.bf16.msra.mxu0 %v2060
        %2074 = vmatprep.subr.bf16.mxu0 0
        %2075 = vmatpush1.bf16.msra.mxu0 %v2061
        %2076 = vmatprep.subr.bf16.mxu0 0
        %2077 = vmatpush1.bf16.msra.mxu0 %v2062
        %2078 = vmatprep.subr.bf16.mxu0 0
        %2079 = vmatpush1.bf16.msra.mxu0 0
        %2080 = vmatprep.subr.bf16.mxu0 0
        %2081 = vmatpush1.bf16.msra.mxu0 0
        %2082 = vmatprep.subr.bf16.mxu0 0
        %2083 = vmatpush1.bf16.msra.mxu0 0
        %2084 = vmatprep.subr.bf16.mxu0 0
        %2085 = vmatpush1.bf16.msra.mxu0 0
        %2086 = vmatprep.subr.bf16.mxu0 0
        %2087 = vmatpush1.bf16.msra.mxu0 0
        %2088 = vmatprep.subr.bf16.mxu0 0
        %2089 = vmatpush1.bf16.msra.mxu0 0
        %2090 = vmatprep.subr.bf16.mxu0 0
        %2091 = vmatpush1.bf16.msra.mxu0 0
        %2092 = vmatprep.subr.bf16.mxu0 0
        %2093 = vmatpush1.bf16.msra.mxu0 0
        %2094 = vmatprep.subr.bf16.mxu0 0
        %2095 = vmatpush1.bf16.msra.mxu0 0
        %2096 = vmatprep.subr.bf16.mxu0 0
        %2097 = vmatpush1.bf16.msra.mxu0 0
        %2098 = vmatprep.subr.bf16.mxu0 0
        %2099 = vmatpush1.bf16.msra.mxu0 0
        %2100 = vmatprep.subr.bf16.mxu0 0
        %2101 = vmatpush1.bf16.msra.mxu0 0
        %2102 = vmatprep.mubr.bf16.mxu0 0
        %2103 = vmatmul.mubr.bf16.gmra.mrb[0].mxu0 %v2068
        %v2104 = vpop.f32.mrb[0].mxu0
        %v2105 = vadd.f32 0.0, %v2104
        %v2106 = vpop.f32.mrb[0].mxu0
        %v2107 = vpop.f32.mrb[0].mxu0
        %v2108 = vadd.f32 0.0, %v2107
        %v2109 = vpop.f32.mrb[0].mxu0
        %2110 = vdwg.mxu0
        %v2119 = vunpack.c.l.b16 %v464
        %v2120 = vunpack.c.l.b16 %v465
        %v2121 = vunpack.c.l.b16 %v466
        %v2122 = vunpack.c.l.b16 %v467
        %v2123 = vunpack.c.l.b16 %v468
        %v2124 = vunpack.c.l.b16 %v469
        %v2125 = vunpack.c.l.b16 %v470
        %v2126 = vunpack.c.l.b16 %v471
        %v2127 = vpack.c.b16 %v2120, %v2119
        %v2128 = vpack.c.b16 %v2122, %v2121
        %v2129 = vpack.c.b16 %v2124, %v2123
        %v2130 = vpack.c.b16 %v2126, %v2125
        %2135 = vmatprep.subr.bf16.mxu0 0
        %2136 = vmatpush1.bf16.msra.mxu0 %v2127
        %2137 = vmatprep.subr.bf16.mxu0 0
        %2138 = vmatpush1.bf16.msra.mxu0 %v2128
        %2139 = vmatprep.subr.bf16.mxu0 0
        %2140 = vmatpush1.bf16.msra.mxu0 %v2129
        %2141 = vmatprep.subr.bf16.mxu0 0
        %2142 = vmatpush1.bf16.msra.mxu0 %v2130
        %2143 = vmatprep.subr.bf16.mxu0 0
        %2144 = vmatpush1.bf16.msra.mxu0 0
        %2145 = vmatprep.subr.bf16.mxu0 0
        %2146 = vmatpush1.bf16.msra.mxu0 0
        %2147 = vmatprep.subr.bf16.mxu0 0
        %2148 = vmatpush1.bf16.msra.mxu0 0
        %2149 = vmatprep.subr.bf16.mxu0 0
        %2150 = vmatpush1.bf16.msra.mxu0 0
        %2151 = vmatprep.subr.bf16.mxu0 0
        %2152 = vmatpush1.bf16.msra.mxu0 0
        %2153 = vmatprep.subr.bf16.mxu0 0
        %2154 = vmatpush1.bf16.msra.mxu0 0
        %2155 = vmatprep.subr.bf16.mxu0 0
        %2156 = vmatpush1.bf16.msra.mxu0 0
        %2157 = vmatprep.subr.bf16.mxu0 0
        %2158 = vmatpush1.bf16.msra.mxu0 0
        %2159 = vmatprep.subr.bf16.mxu0 0
        %2160 = vmatpush1.bf16.msra.mxu0 0
        %2161 = vmatprep.subr.bf16.mxu0 0
        %2162 = vmatpush1.bf16.msra.mxu0 0
        %2163 = vmatprep.subr.bf16.mxu0 0
        %2164 = vmatpush1.bf16.msra.mxu0 0
        %2165 = vmatprep.subr.bf16.mxu0 0
        %2166 = vmatpush1.bf16.msra.mxu0 0
        %2167 = vmatprep.mubr.bf16.mxu0 0
        %2168 = vmatmul.mubr.bf16.gmra.mrb[0].mxu0 %v787
        %v2169 = vpop.f32.mrb[0].mxu0
        %v2170 = vadd.f32 %v2105, %v2169
        %v2171 = vpop.f32.mrb[0].mxu0
        %v2172 = vpop.f32.mrb[0].mxu0
        %v2173 = vadd.f32 %v2108, %v2172
        %v2174 = vpop.f32.mrb[0].mxu0
        %2175 = vdwg.mxu0
        %2176 = vst.msk [vmem:[%s362] sm:$0xff] %vm514, %v2170
        %2177 = vst.msk [vmem:[%s362 + $0x8] sm:$0xff] %vm514, %v2173
        %s2178 = sand.u32 %s240, 1
        %s2179 = scalar_lea.sflag [#allocation3], %s2178
        %s2180 = sand.u32 %s240, 1
        %s2181 = smul.addr %s2180, 16
        %s2182 = scalar_lea.vmem [#allocation2], %s2181
        // Predicated region
        $region57: #{lgcn_forward.1} parent=55 // pred_check
          %p2183 = pneg %p250
        $region58: #{lgcn_forward.1} parent=55 // pred_check_branch
          %2185 = sbr.rel (%p2183) target = $region60
        $region59: #{lgcn_forward.1} parent=55 // pred_region
          %s2187 = ssub.s32 256, 256
          %2188 = vsyncadd %s2179, %s2187
          %s2189 = smul.addr %s23, 2
          %s2190 = smul.addr %s2189, 128
          %s2191 = scalar_lea.hbm %s9, %s2190
          %s2192 = sshll.u32 %s2182, 4
          %s2193 = int_to_ptr.vmem [resolvable:$true] %s2192
          %2198 = dma.vmem_to_hbm [thread:$0]  %s2193, 256, %s2191, %s2179, 128, 128, 8
        $region60: #{lgcn_forward.1} parent=55 // pred_fallthru
          _
      $region56: #{lgcn_forward.1} parent=5 // pred_fallthru
        _
      %p2199 = scmp.le.s32.totalorder 2, %s18
      // Predicated region
      $region61: #{lgcn_forward.1} parent=5 // pred_check
        %p2200 = pneg %p2199
      $region62: #{lgcn_forward.1} parent=5 // pred_check_branch
        %2202 = sbr.rel (%p2200) target = $region64
      $region63: #{lgcn_forward.1} parent=5 // pred_region
        %s2203 = ssub.s32 %s18, 2
        // Predicated region
        $region65: #{lgcn_forward.1} parent=63 // pred_check
          %p2204 = pneg %p256
        $region66: #{lgcn_forward.1} parent=63 // pred_check_branch
          %2206 = sbr.rel (%p2204) target = $region68
        $region67: #{lgcn_forward.1} parent=63 // pred_region
          %s2207 = sand.u32 %s241, 1
          %s2208 = scalar_lea.sflag [#allocation3], %s2207
          %s2209 = sand.u32 %s241, 1
          %s2210 = smul.addr %s2209, 16
          %s2211 = scalar_lea.vmem [#allocation2], %s2210
          %2212 = dma.done %s2208, 256
        $region68: #{lgcn_forward.1} parent=63 // pred_fallthru
          _
      $region64: #{lgcn_forward.1} parent=5 // pred_fallthru
        _
    $region6: #{lgcn_forward.1} parent=1 // loop_footer
      %s22 = sadd.s32 1, %s18
    $region7: #{lgcn_forward.1} parent=1 // loop_footer_branch
      %17 = sbr.rel target = $region3
    $region8: #{lgcn_forward.1} parent=1 // loop_exit
      _
    %2213 = vsyncpa [#allocation3], 1
    %s2214 = scalar_lea.sflag [#allocation3], 1
    %2215 = vsyncpa %s2214, 1

</llo_original>
